<compile_context>
chip_gen: v5e
topology: v5e:2x2
jax: 0.10.0
libtpu: 0.0.40
codegen_flags: <defaults>
</compile_context>

<pallas_src>
import functools

import jax
import jax.numpy as jnp
from jax import lax
from jax.experimental import pallas as pl
from jax.experimental.pallas import tpu as pltpu


# ---------------------------------------------------------------------------
# weight packing helpers (gate-interleaved layout: [i_f,i_b, f_f,f_b, g_f,g_b, o_f,o_b])
# ---------------------------------------------------------------------------
def _pack_dirs(wf, wb, H):
    """(.., 4H) fwd & bwd -> (.., 8H) with per-gate [fwd | bwd] interleaving."""
    shp = wf.shape[:-1]
    stacked = jnp.stack([wf.reshape(*shp, 4, H), wb.reshape(*shp, 4, H)], axis=-2)
    return stacked.reshape(*shp, 8 * H)


# ---------------------------------------------------------------------------
# fused kernel: input proj + BiLSTM + hidden2tag + CRF Viterbi (forward + backtrace)
# ---------------------------------------------------------------------------
def _fused_kernel(x_ref, wih_ref, bih_ref, whh_ref, wtag_ref, btag_ref,
                  trans_ref, tstop_ref, mask_ref, len_ref,
                  decode_ref,
                  ih_scr, hf_scr, hb_scr, feat_scr, bp_scr,
                  *, T, Bp, H, L, Lpad, start_idx):
    H2 = 2 * H

    # ---- phase 0: input projection, both directions & all timesteps, ONE matmul ------
    ih_scr[...] = (jnp.dot(x_ref[...], wih_ref[...],
                           preferred_element_type=jnp.float32) + bih_ref[...])

    whh = whh_ref[...]                                            # (2H, 8H) bf16, block-diag
    is_fwd_h2 = lax.broadcasted_iota(jnp.int32, (Bp, H2), 1) < H  # (Bp, 2H)

    # ---- phase 1: fused fwd/bwd LSTM recurrence --------------------------------------
    # forward stream reads natural time s; backward stream reads time T-1-s with state
    # frozen on mask==0 (== pack_padded_sequence semantics).
    def lstm_step(s, carry):
        h, c = carry                                              # (Bp, 2H) f32 each
        r_f = pl.multiple_of(s * Bp, Bp)
        r_b = pl.multiple_of((T - 1 - s) * Bp, Bp)
        ih_t = ih_scr[pl.ds(r_f, Bp), :]                          # (Bp, 8H) f32 (fwd@s | bwd@T-1-s)
        m = mask_ref[pl.ds(r_f, Bp), :]                           # (Bp, 2)  [mask[s], mask[T-1-s]]
        m_f = m[:, 0:1]
        m_b = m[:, 1:2]
        gates = ih_t + jnp.dot(h.astype(jnp.bfloat16), whh,
                               preferred_element_type=jnp.float32)
        i_g = jax.nn.sigmoid(gates[:, 0 * H2:1 * H2])
        f_g = jax.nn.sigmoid(gates[:, 1 * H2:2 * H2])
        g_g = jnp.tanh(gates[:, 2 * H2:3 * H2])
        o_g = jax.nn.sigmoid(gates[:, 3 * H2:4 * H2])
        c_new = f_g * c + i_g * g_g
        h_new = o_g * jnp.tanh(c_new)
        # masked LSTM-output histories (what hidden2tag consumes)
        hf_scr[pl.ds(r_f, Bp), :] = h_new[:, 0:H] * m_f
        hb_scr[pl.ds(r_b, Bp), :] = h_new[:, H:H2] * m_b
        # freeze state on padded steps (first H lanes fwd, last H lanes bwd)
        m2 = jnp.where(is_fwd_h2, m_f, m_b)
        return (m2 * h_new + (1.0 - m2) * h, m2 * c_new + (1.0 - m2) * c)

    zeros_h = jnp.zeros((Bp, H2), jnp.float32)
    lax.fori_loop(0, T, lstm_step, (zeros_h, zeros_h))

    # ---- phase 2a: hidden2tag hoisted OUT of the serial Viterbi loop ------------------
    feat_scr[...] = (jnp.dot(hf_scr[...].astype(jnp.bfloat16), wtag_ref[0:H, :],
                             preferred_element_type=jnp.float32)
                     + jnp.dot(hb_scr[...].astype(jnp.bfloat16), wtag_ref[H:H2, :],
                               preferred_element_type=jnp.float32)
                     + btag_ref[...])                             # (T*Bp, Lpad) f32

    # ---- phase 2b: Viterbi forward recursion (pure VPU/XLU, no matmuls) ---------------
    n_chunks = (L + 7) // 8        # only chunks holding real labels (padded rows are -1e4)
    lane_iota = lax.broadcasted_iota(jnp.int32, (Bp, Lpad), 1)

    part0 = feat_scr[pl.ds(0, Bp), :] + trans_ref[start_idx:start_idx + 1, :]

    def vit_step(t, part):
        r_t = pl.multiple_of(t * Bp, Bp)
        ft = feat_scr[pl.ds(r_t, Bp), :]                          # (Bp, Lpad)
        m_t = mask_ref[pl.ds(r_t, Bp), 0:1] > 0.0                 # (Bp, 1) bool
        run_max = jnp.full((Bp, Lpad), -jnp.inf, jnp.float32)
        run_arg = jnp.zeros((Bp, Lpad), jnp.int32)
        for ic in range(n_chunks):     # running max/argmax over 8-sublane prev-tag chunks
            tr_c = trans_ref[ic * 8:(ic + 1) * 8, :]              # (8, Lpad)
            p_c = part[:, ic * 8:(ic + 1) * 8]                    # (Bp, 8)
            sc = tr_c[None, :, :] + p_c[:, :, None]               # (Bp, 8, Lpad)
            cmax = jnp.max(sc, axis=1)                            # (Bp, Lpad)
            idx3 = lax.broadcasted_iota(jnp.int32, (Bp, 8, Lpad), 1) + ic * 8
            carg = jnp.min(jnp.where(sc == cmax[:, None, :], idx3, Lpad), axis=1)
            take = cmax > run_max                                 # earlier chunk wins ties
            run_arg = jnp.where(take, carg, run_arg)
            run_max = jnp.where(take, cmax, run_max)
        bp_scr[pl.ds(r_t, Bp), :] = jnp.where(m_t, run_arg, 0)    # cur_bp.masked_fill_(~mask, 0)
        new_part = ft + run_max
        return jnp.where(m_t, new_part, part)                     # freeze on padded steps

    part_final = lax.fori_loop(1, T, vit_step, part0)             # == partition at lengths-1

    # ---- phase 3: STOP transition + in-kernel backtrace --------------------------------
    scores_stop = part_final + tstop_ref[...]                     # (Bp, Lpad)
    mx = jnp.max(scores_stop, axis=1, keepdims=True)
    ptr0 = jnp.min(jnp.where(scores_stop == mx, lane_iota, Lpad),
                   axis=1, keepdims=True)                         # (Bp, 1) best prev tag of STOP
    decode_ref[pl.ds((T - 1) * Bp, Bp), :] = ptr0
    last_idx = len_ref[...] - 1                                   # (Bp, 1) int32

    def bt_step(k, ptr):
        idx = T - 2 - k
        bpt = bp_scr[pl.ds(pl.multiple_of((idx + 1) * Bp, Bp), Bp), :]   # (Bp, Lpad)
        g = jnp.min(jnp.where(lane_iota == ptr, bpt, Lpad),
                    axis=1, keepdims=True)                        # one-hot lane gather
        new_ptr = jnp.where(last_idx == idx, ptr, g)              # == scatter of insert_last
        decode_ref[pl.ds(pl.multiple_of(idx * Bp, Bp), Bp), :] = new_ptr
        return new_ptr

    lax.fori_loop(0, T - 1, bt_step, ptr0)


def run_fused(x_cat, w_ih_cat, b_ih, whh, wtag, btag, trans_pad, trans_stop,
              mask_fb, lengths, *, T, Bp, H, L, Lpad):
    TB = T * Bp
    kernel = functools.partial(_fused_kernel, T=T, Bp=Bp, H=H, L=L, Lpad=Lpad,
                               start_idx=L - 2)

    def full(a):
        nd = a.ndim
        return pl.BlockSpec(a.shape, lambda i, nd=nd: (0,) * nd)

    args = (x_cat, w_ih_cat, b_ih, whh, wtag, btag, trans_pad, trans_stop,
            mask_fb, lengths)
    return pl.pallas_call(
        kernel,
        out_shape=jax.ShapeDtypeStruct((TB, 1), jnp.int32),       # only the decode leaves VMEM
        grid=(1,),
        in_specs=[full(a) for a in args],
        out_specs=pl.BlockSpec((TB, 1), lambda i: (0, 0)),
        # TODO(synk): at production T/B this monolithic layout should be T-tiled (streamed
        # ih/feats/bp blocks, persistent h/c/partition scratch) and the batch split across
        # v7x's two TensorCores; at these sizes everything fits comfortably in VMEM.
        scratch_shapes=[pltpu.VMEM((TB, 8 * H), jnp.float32),     # input projection
                        pltpu.VMEM((TB, H), jnp.float32),         # masked fwd h history
                        pltpu.VMEM((TB, H), jnp.float32),         # masked bwd h history
                        pltpu.VMEM((TB, Lpad), jnp.float32),      # hidden2tag feats
                        pltpu.VMEM((TB, Lpad), jnp.int32)],       # Viterbi backpointers
        compiler_params=pltpu.CompilerParams(
            dimension_semantics=("arbitrary",),
            vmem_limit_bytes=32 * 1024 * 1024),
    )(*args)


# ---------------------------------------------------------------------------
# parameter init (deterministic, synthetic)
# ---------------------------------------------------------------------------
def init_params(key, vocab_w, vocab_b, Ew, Eb, hidden_dim, label_size):
    L = label_size + 2                 # CRF appends START/STOP
    E = Ew + Eb
    H = hidden_dim // 2                # per direction (bidirectional)
    keys = jax.random.split(key, 11)

    def rn(k, shape, scale=0.1):
        return scale * jax.random.normal(k, shape, dtype=jnp.float32)

    trans = rn(keys[10], (L, L))
    trans = trans.at[:, L - 2].set(-10000.0)   # nothing transitions INTO START
    trans = trans.at[L - 1, :].set(-10000.0)   # nothing transitions OUT OF STOP
    return dict(
        word_emb=rn(keys[0], (vocab_w, Ew)),
        biword_emb=rn(keys[1], (vocab_b, Eb)),
        w_ih_f=rn(keys[2], (E, 4 * H)), w_hh_f=rn(keys[3], (H, 4 * H)),
        b_f=rn(keys[4], (1, 4 * H)),
        w_ih_b=rn(keys[5], (E, 4 * H)), w_hh_b=rn(keys[6], (H, 4 * H)),
        b_b=rn(keys[7], (1, 4 * H)),
        w_tag=rn(keys[8], (hidden_dim, L)), b_tag=rn(keys[9], (1, L)),
        transitions=trans,
    )


# ---------------------------------------------------------------------------
# forward (is_ner=False path): everything inside one fused kernel
# ---------------------------------------------------------------------------
@jax.jit
def bilstm_crf_forward(params, word_inputs, biword_inputs, mask):
    B, T = word_inputs.shape
    L = params["transitions"].shape[0]
    H = params["w_hh_f"].shape[0]
    Lpad = ((L + 127) // 128) * 128            # lane-dense CRF label axis
    Bp = ((B + 7) // 8) * 8                    # sublane-aligned batch (padded rows masked out)
    pad_b = Bp - B

    wid = jnp.pad(word_inputs, ((0, pad_b), (0, 0)))
    bid = jnp.pad(biword_inputs, ((0, pad_b), (0, 0)))
    msk = jnp.pad(mask, ((0, pad_b), (0, 0)))

    # embeddings gathered directly in TIME-MAJOR order; backward stream gets the
    # time-reversed copy so the kernel's recurrence needs no per-step select.
    we = jnp.take(params["word_emb"], wid.T, axis=0)              # (T, Bp, Ew)
    be = jnp.take(params["biword_emb"], bid.T, axis=0)            # (T, Bp, Eb)
    x_tm = jnp.concatenate([we, be], axis=-1)                     # (T, Bp, E)
    E = x_tm.shape[-1]
    x_cat = jnp.concatenate([x_tm, x_tm[::-1]], axis=-1)          # (T, Bp, 2E) [x[t] | x[T-1-t]]
    x_cat = x_cat.reshape(T * Bp, 2 * E).astype(jnp.bfloat16)
    # TODO(synk): char-feature sub-encoder and gazetteer/lattice-LSTM branch of the original
    # BiLSTM are not reproduced (no gaz data); dropout = identity (eval).

    # packed weights: x_cat rows 0:E feed fwd gate columns, rows E:2E feed bwd gate columns
    z_ih = jnp.zeros_like(params["w_ih_f"])
    w_ih_cat = jnp.concatenate([_pack_dirs(params["w_ih_f"], z_ih, H),
                                _pack_dirs(z_ih, params["w_ih_b"], H)],
                               axis=0).astype(jnp.bfloat16)       # (2E, 8H)
    b_ih = _pack_dirs(params["b_f"], params["b_b"], H)            # (1, 8H) f32
    z_hh = jnp.zeros_like(params["w_hh_f"])
    whh = jnp.concatenate([_pack_dirs(params["w_hh_f"], z_hh, H),
                           _pack_dirs(z_hh, params["w_hh_b"], H)],
                          axis=0).astype(jnp.bfloat16)            # (2H, 8H) block-diag
    wtag = jnp.pad(params["w_tag"], ((0, 0), (0, Lpad - L))).astype(jnp.bfloat16)
    btag = jnp.pad(params["b_tag"], ((0, 0), (0, Lpad - L)), constant_values=-10000.0)
    trans_pad = jnp.pad(params["transitions"], ((0, Lpad - L), (0, Lpad - L)),
                        constant_values=-10000.0)
    trans_stop = trans_pad[:, L - 1][None, :]                     # (1, Lpad): scores into STOP

    m_tm = msk.T.astype(jnp.float32)                              # (T, Bp)
    mask_fb = jnp.stack([m_tm, m_tm[::-1]], axis=-1).reshape(T * Bp, 2)
    lengths = jnp.sum(msk, axis=1).astype(jnp.int32)[:, None]     # (Bp, 1)

    decode_flat = run_fused(x_cat, w_ih_cat, b_ih, whh, wtag, btag,
                            trans_pad, trans_stop, mask_fb, lengths,
                            T=T, Bp=Bp, H=H, L=L, Lpad=Lpad)      # (T*Bp, 1) int32
    decode = decode_flat.reshape(T, Bp)[:, :B].T                  # (B, T) tag_seq
    return decode.astype(jnp.int32)


if __name__ == "__main__":
    B, T = 2, 8
    vocab_w, vocab_b = 50, 60
    Ew, Eb = 16, 16
    hidden_dim = 32          # bidirectional -> 16 per direction
    label_size = 8           # CRF adds START/STOP -> L = 10 (padded to 128 lanes)

    key = jax.random.PRNGKey(0)
    kp, kw, kb = jax.random.split(key, 3)
    params = init_params(kp, vocab_w, vocab_b, Ew, Eb, hidden_dim, label_size)

    word_inputs = jax.random.randint(kw, (B, T), 0, vocab_w, dtype=jnp.int32)
    biword_inputs = jax.random.randint(kb, (B, T), 0, vocab_b, dtype=jnp.int32)
    mask = jnp.array([[1, 1, 1, 1, 1, 1, 1, 1],
                      [1, 1, 1, 1, 1, 1, 0, 0]], dtype=jnp.int32)

    tag_seq = bilstm_crf_forward(params, word_inputs, biword_inputs, mask)
    jax.block_until_ready(tag_seq)
    assert tag_seq.shape == (B, T)
    print("KERNEL_OK")
</pallas_src>

<mosaic_0001>
module attributes {stable_mosaic.version = 11 : i64} {
  func.func @_fused_kernel(%arg0: i32, %arg1: memref<64x64xbf16, #tpu.memory_space<vmem>>, %arg2: memref<64x128xbf16, #tpu.memory_space<vmem>>, %arg3: memref<1x128xf32, #tpu.memory_space<vmem>>, %arg4: memref<32x128xbf16, #tpu.memory_space<vmem>>, %arg5: memref<32x128xbf16, #tpu.memory_space<vmem>>, %arg6: memref<1x128xf32, #tpu.memory_space<vmem>>, %arg7: memref<128x128xf32, #tpu.memory_space<vmem>>, %arg8: memref<1x128xf32, #tpu.memory_space<vmem>>, %arg9: memref<64x2xf32, #tpu.memory_space<vmem>>, %arg10: memref<8x1xi32, #tpu.memory_space<vmem>>, %arg11: memref<64x1xi32, #tpu.memory_space<vmem>>, %arg12: memref<64x128xf32, #tpu.memory_space<vmem>>, %arg13: memref<64x16xf32, #tpu.memory_space<vmem>>, %arg14: memref<64x16xf32, #tpu.memory_space<vmem>>, %arg15: memref<64x128xf32, #tpu.memory_space<vmem>>, %arg16: memref<64x128xi32, #tpu.memory_space<vmem>>) attributes {dimension_semantics = [#tpu.dimension_semantics<arbitrary>], iteration_bounds = array<i64: 1>, scalar_prefetch = 0 : i64, scratch_operands = 5 : i64, tpu.core_type = #tpu.core_type<tc>, window_params = [{pipeline_mode = #tpu.pipeline_mode<synchronous>, transform_indices = @transform_0, window_bounds = array<i64: 64, 64>}, {pipeline_mode = #tpu.pipeline_mode<synchronous>, transform_indices = @transform_1, window_bounds = array<i64: 64, 128>}, {pipeline_mode = #tpu.pipeline_mode<synchronous>, transform_indices = @transform_2, window_bounds = array<i64: 1, 128>}, {pipeline_mode = #tpu.pipeline_mode<synchronous>, transform_indices = @transform_3, window_bounds = array<i64: 32, 128>}, {pipeline_mode = #tpu.pipeline_mode<synchronous>, transform_indices = @transform_4, window_bounds = array<i64: 32, 128>}, {pipeline_mode = #tpu.pipeline_mode<synchronous>, transform_indices = @transform_5, window_bounds = array<i64: 1, 128>}, {pipeline_mode = #tpu.pipeline_mode<synchronous>, transform_indices = @transform_6, window_bounds = array<i64: 128, 128>}, {pipeline_mode = #tpu.pipeline_mode<synchronous>, transform_indices = @transform_7, window_bounds = array<i64: 1, 128>}, {pipeline_mode = #tpu.pipeline_mode<synchronous>, transform_indices = @transform_8, window_bounds = array<i64: 64, 2>}, {pipeline_mode = #tpu.pipeline_mode<synchronous>, transform_indices = @transform_9, window_bounds = array<i64: 8, 1>}, {pipeline_mode = #tpu.pipeline_mode<synchronous>, transform_indices = @transform_10, window_bounds = array<i64: 64, 1>}]} {
    %c0 = arith.constant 0 : index
    %c0_0 = arith.constant 0 : index
    %0 = vector.load %arg1[%c0, %c0_0] : memref<64x64xbf16, #tpu.memory_space<vmem>>, vector<64x64xbf16>
    %c0_1 = arith.constant 0 : index
    %c0_2 = arith.constant 0 : index
    %1 = vector.load %arg2[%c0_1, %c0_2] : memref<64x128xbf16, #tpu.memory_space<vmem>>, vector<64x128xbf16>
    %cst = arith.constant dense<0.000000e+00> : vector<64x128xf32>
    %2 = tpu.matmul %0, %1, %cst {dimension_numbers = #tpu.dot_dimension_numbers<[1], [0], [0], [1], [0, 0, 1, 1], [], []>} : vector<64x64xbf16>, vector<64x128xbf16>, vector<64x128xf32> -> vector<64x128xf32>
    %c0_3 = arith.constant 0 : index
    %c0_4 = arith.constant 0 : index
    %3 = vector.load %arg3[%c0_3, %c0_4] : memref<1x128xf32, #tpu.memory_space<vmem>>, vector<1x128xf32>
    %4 = vector.broadcast %3 : vector<1x128xf32> to vector<64x128xf32>
    %5 = arith.addf %2, %4 : vector<64x128xf32>
    %c0_5 = arith.constant 0 : index
    %c0_6 = arith.constant 0 : index
    %6 = vector.load %arg12[%c0_5, %c0_6] : memref<64x128xf32, #tpu.memory_space<vmem>>, vector<64x128xf32>
    tpu.vector_store %arg12[%c0_5, %c0_6], %5 {strides = array<i32>} : memref<64x128xf32, #tpu.memory_space<vmem>>, vector<64x128xf32>,
    %c0_7 = arith.constant 0 : index
    %c0_8 = arith.constant 0 : index
    %7 = vector.load %arg4[%c0_7, %c0_8] : memref<32x128xbf16, #tpu.memory_space<vmem>>, vector<32x128xbf16>
    %8 = tpu.iota {dimensions = array<i32: 1>} : vector<8x32xi32>
    %c16_i32 = arith.constant 16 : i32
    %9 = vector.broadcast %c16_i32 : i32 to vector<8x32xi32>
    %10 = arith.cmpi slt, %8, %9 : vector<8x32xi32>
    %cst_9 = arith.constant 0.000000e+00 : f32
    %11 = vector.broadcast %cst_9 : f32 to vector<8x32xf32>
    %c0_i32 = arith.constant 0 : i32
    %c8_i32 = arith.constant 8 : i32
    %12 = arith.addi %c0_i32, %c8_i32 : i32
    %c1_i32 = arith.constant 1 : i32
    %13:2 = scf.for %arg17 = %c0_i32 to %12 step %c1_i32 iter_args(%arg18 = %11, %arg19 = %11) -> (vector<8x32xf32>, vector<8x32xf32>)  : i32 {
      %c8_i32_42 = arith.constant 8 : i32
      %51 = arith.muli %arg17, %c8_i32_42 : i32
      %52 = tpu.assume_multiple %51, 8 : i32
      %c7_i32_43 = arith.constant 7 : i32
      %53 = arith.subi %c7_i32_43, %arg17 : i32
      %c8_i32_44 = arith.constant 8 : i32
      %54 = arith.muli %53, %c8_i32_44 : i32
      %55 = tpu.assume_multiple %54, 8 : i32
      %56 = arith.index_cast %52 : i32 to index
      %c0_45 = arith.constant 0 : index
      %57 = vector.load %arg12[%56, %c0_45] : memref<64x128xf32, #tpu.memory_space<vmem>>, vector<8x128xf32>
      %58 = arith.index_cast %52 : i32 to index
      %c0_46 = arith.constant 0 : index
      %59 = vector.load %arg9[%58, %c0_46] : memref<64x2xf32, #tpu.memory_space<vmem>>, vector<8x2xf32>
      %60 = vector.extract_strided_slice %59 {offsets = [0, 0], sizes = [8, 1], strides = [1, 1]} : vector<8x2xf32> to vector<8x1xf32>
      %61 = vector.extract_strided_slice %59 {offsets = [0, 1], sizes = [8, 1], strides = [1, 1]} : vector<8x2xf32> to vector<8x1xf32>
      %62 = arith.truncf %arg18 : vector<8x32xf32> to vector<8x32xbf16>
      %cst_47 = arith.constant dense<0.000000e+00> : vector<8x128xf32>
      %63 = tpu.matmul %62, %7, %cst_47 {dimension_numbers = #tpu.dot_dimension_numbers<[1], [0], [0], [1], [0, 0, 1, 1], [], []>} : vector<8x32xbf16>, vector<32x128xbf16>, vector<8x128xf32> -> vector<8x128xf32>
      %64 = arith.addf %57, %63 : vector<8x128xf32>
      %65 = vector.extract_strided_slice %64 {offsets = [0, 0], sizes = [8, 32], strides = [1, 1]} : vector<8x128xf32> to vector<8x32xf32>
      %66 = arith.negf %65 : vector<8x32xf32>
      %67 = math.exp %66 : vector<8x32xf32>
      %cst_48 = arith.constant 1.000000e+00 : f32
      %68 = vector.broadcast %cst_48 : f32 to vector<8x32xf32>
      %69 = arith.addf %68, %67 : vector<8x32xf32>
      %70 = arith.divf %68, %69 : vector<8x32xf32>
      %71 = vector.extract_strided_slice %64 {offsets = [0, 32], sizes = [8, 32], strides = [1, 1]} : vector<8x128xf32> to vector<8x32xf32>
      %72 = arith.negf %71 : vector<8x32xf32>
      %73 = math.exp %72 : vector<8x32xf32>
      %cst_49 = arith.constant 1.000000e+00 : f32
      %74 = vector.broadcast %cst_49 : f32 to vector<8x32xf32>
      %75 = arith.addf %74, %73 : vector<8x32xf32>
      %76 = arith.divf %74, %75 : vector<8x32xf32>
      %77 = vector.extract_strided_slice %64 {offsets = [0, 64], sizes = [8, 32], strides = [1, 1]} : vector<8x128xf32> to vector<8x32xf32>
      %78 = math.tanh %77 : vector<8x32xf32>
      %79 = vector.extract_strided_slice %64 {offsets = [0, 96], sizes = [8, 32], strides = [1, 1]} : vector<8x128xf32> to vector<8x32xf32>
      %80 = arith.negf %79 : vector<8x32xf32>
      %81 = math.exp %80 : vector<8x32xf32>
      %cst_50 = arith.constant 1.000000e+00 : f32
      %82 = vector.broadcast %cst_50 : f32 to vector<8x32xf32>
      %83 = arith.addf %82, %81 : vector<8x32xf32>
      %84 = arith.divf %82, %83 : vector<8x32xf32>
      %85 = arith.mulf %76, %arg19 : vector<8x32xf32>
      %86 = arith.mulf %70, %78 : vector<8x32xf32>
      %87 = arith.addf %85, %86 : vector<8x32xf32>
      %88 = math.tanh %87 : vector<8x32xf32>
      %89 = arith.mulf %84, %88 : vector<8x32xf32>
      %90 = vector.extract_strided_slice %89 {offsets = [0, 0], sizes = [8, 16], strides = [1, 1]} : vector<8x32xf32> to vector<8x16xf32>
      %91 = vector.broadcast %60 : vector<8x1xf32> to vector<8x16xf32>
      %92 = arith.mulf %90, %91 : vector<8x16xf32>
      %93 = arith.index_cast %52 : i32 to index
      %c0_51 = arith.constant 0 : index
      %94 = vector.load %arg13[%93, %c0_51] : memref<64x16xf32, #tpu.memory_space<vmem>>, vector<8x16xf32>
      tpu.vector_store %arg13[%93, %c0_51], %92 {strides = array<i32>} : memref<64x16xf32, #tpu.memory_space<vmem>>, vector<8x16xf32>,
      %95 = vector.extract_strided_slice %89 {offsets = [0, 16], sizes = [8, 16], strides = [1, 1]} : vector<8x32xf32> to vector<8x16xf32>
      %96 = vector.broadcast %61 : vector<8x1xf32> to vector<8x16xf32>
      %97 = arith.mulf %95, %96 : vector<8x16xf32>
      %98 = arith.index_cast %55 : i32 to index
      %c0_52 = arith.constant 0 : index
      %99 = vector.load %arg14[%98, %c0_52] : memref<64x16xf32, #tpu.memory_space<vmem>>, vector<8x16xf32>
      tpu.vector_store %arg14[%98, %c0_52], %97 {strides = array<i32>} : memref<64x16xf32, #tpu.memory_space<vmem>>, vector<8x16xf32>,
      %100 = vector.shape_cast %60 : vector<8x1xf32> to vector<8x1xf32>
      %101 = vector.broadcast %100 : vector<8x1xf32> to vector<8x32xf32>
      %102 = vector.shape_cast %61 : vector<8x1xf32> to vector<8x1xf32>
      %103 = vector.broadcast %102 : vector<8x1xf32> to vector<8x32xf32>
      %104 = arith.select %10, %101, %103 : vector<8x32xi1>, vector<8x32xf32>
      %105 = arith.mulf %104, %89 : vector<8x32xf32>
      %cst_53 = arith.constant 1.000000e+00 : f32
      %106 = vector.broadcast %cst_53 : f32 to vector<8x32xf32>
      %107 = arith.subf %106, %104 : vector<8x32xf32>
      %108 = arith.mulf %107, %arg18 : vector<8x32xf32>
      %109 = arith.addf %105, %108 : vector<8x32xf32>
      %110 = arith.mulf %104, %87 : vector<8x32xf32>
      %cst_54 = arith.constant 1.000000e+00 : f32
      %111 = vector.broadcast %cst_54 : f32 to vector<8x32xf32>
      %112 = arith.subf %111, %104 : vector<8x32xf32>
      %113 = arith.mulf %112, %arg19 : vector<8x32xf32>
      %114 = arith.addf %110, %113 : vector<8x32xf32>
      scf.yield %109, %114 : vector<8x32xf32>, vector<8x32xf32>
    }
    %c8_i32_10 = arith.constant 8 : i32
    %c0_11 = arith.constant 0 : index
    %c0_12 = arith.constant 0 : index
    %14 = vector.load %arg13[%c0_11, %c0_12] : memref<64x16xf32, #tpu.memory_space<vmem>>, vector<64x16xf32>
    %15 = arith.truncf %14 : vector<64x16xf32> to vector<64x16xbf16>
    %c0_13 = arith.constant 0 : index
    %c0_14 = arith.constant 0 : index
    %16 = vector.load %arg5[%c0_13, %c0_14] : memref<32x128xbf16, #tpu.memory_space<vmem>>, vector<16x128xbf16>
    %cst_15 = arith.constant dense<0.000000e+00> : vector<64x128xf32>
    %17 = tpu.matmul %15, %16, %cst_15 {dimension_numbers = #tpu.dot_dimension_numbers<[1], [0], [0], [1], [0, 0, 1, 1], [], []>} : vector<64x16xbf16>, vector<16x128xbf16>, vector<64x128xf32> -> vector<64x128xf32>
    %c0_16 = arith.constant 0 : index
    %c0_17 = arith.constant 0 : index
    %18 = vector.load %arg14[%c0_16, %c0_17] : memref<64x16xf32, #tpu.memory_space<vmem>>, vector<64x16xf32>
    %19 = arith.truncf %18 : vector<64x16xf32> to vector<64x16xbf16>
    %c16 = arith.constant 16 : index
    %c0_18 = arith.constant 0 : index
    %20 = vector.load %arg5[%c16, %c0_18] : memref<32x128xbf16, #tpu.memory_space<vmem>>, vector<16x128xbf16>
    %cst_19 = arith.constant dense<0.000000e+00> : vector<64x128xf32>
    %21 = tpu.matmul %19, %20, %cst_19 {dimension_numbers = #tpu.dot_dimension_numbers<[1], [0], [0], [1], [0, 0, 1, 1], [], []>} : vector<64x16xbf16>, vector<16x128xbf16>, vector<64x128xf32> -> vector<64x128xf32>
    %22 = arith.addf %17, %21 : vector<64x128xf32>
    %c0_20 = arith.constant 0 : index
    %c0_21 = arith.constant 0 : index
    %23 = vector.load %arg6[%c0_20, %c0_21] : memref<1x128xf32, #tpu.memory_space<vmem>>, vector<1x128xf32>
    %24 = vector.broadcast %23 : vector<1x128xf32> to vector<64x128xf32>
    %25 = arith.addf %22, %24 : vector<64x128xf32>
    %c0_22 = arith.constant 0 : index
    %c0_23 = arith.constant 0 : index
    %26 = vector.load %arg15[%c0_22, %c0_23] : memref<64x128xf32, #tpu.memory_space<vmem>>, vector<64x128xf32>
    tpu.vector_store %arg15[%c0_22, %c0_23], %25 {strides = array<i32>} : memref<64x128xf32, #tpu.memory_space<vmem>>, vector<64x128xf32>,
    %27 = tpu.iota {dimensions = array<i32: 1>} : vector<8x128xi32>
    %c0_24 = arith.constant 0 : index
    %c0_25 = arith.constant 0 : index
    %28 = vector.load %arg15[%c0_24, %c0_25] : memref<64x128xf32, #tpu.memory_space<vmem>>, vector<8x128xf32>
    %c8 = arith.constant 8 : index
    %c0_26 = arith.constant 0 : index
    %29 = vector.load %arg7[%c8, %c0_26] : memref<128x128xf32, #tpu.memory_space<vmem>>, vector<1x128xf32>
    %30 = vector.broadcast %29 : vector<1x128xf32> to vector<8x128xf32>
    %31 = arith.addf %28, %30 : vector<8x128xf32>
    %c1_i32_27 = arith.constant 1 : i32
    %c7_i32 = arith.constant 7 : i32
    %32 = arith.addi %c1_i32_27, %c7_i32 : i32
    %c1_i32_28 = arith.constant 1 : i32
    %33 = scf.for %arg17 = %c1_i32_27 to %32 step %c1_i32_28 iter_args(%arg18 = %31) -> (vector<8x128xf32>)  : i32 {
      %c8_i32_42 = arith.constant 8 : i32
      %51 = arith.muli %arg17, %c8_i32_42 : i32
      %52 = tpu.assume_multiple %51, 8 : i32
      %53 = arith.index_cast %52 : i32 to index
      %c0_43 = arith.constant 0 : index
      %54 = vector.load %arg15[%53, %c0_43] : memref<64x128xf32, #tpu.memory_space<vmem>>, vector<8x128xf32>
      %55 = arith.index_cast %52 : i32 to index
      %c0_44 = arith.constant 0 : index
      %56 = vector.load %arg9[%55, %c0_44] : memref<64x2xf32, #tpu.memory_space<vmem>>, vector<8x1xf32>
      %cst_45 = arith.constant 0.000000e+00 : f32
      %57 = vector.broadcast %cst_45 : f32 to vector<8x1xf32>
      %58 = arith.cmpf ogt, %56, %57 : vector<8x1xf32>
      %cst_46 = arith.constant 0xFF800000 : f32
      %59 = vector.broadcast %cst_46 : f32 to vector<8x128xf32>
      %c0_i32_47 = arith.constant 0 : i32
      %60 = vector.broadcast %c0_i32_47 : i32 to vector<8x128xi32>
      %c0_48 = arith.constant 0 : index
      %c0_49 = arith.constant 0 : index
      %61 = vector.load %arg7[%c0_48, %c0_49] : memref<128x128xf32, #tpu.memory_space<vmem>>, vector<8x128xf32>
      %62 = vector.extract_strided_slice %arg18 {offsets = [0, 0], sizes = [8, 8], strides = [1, 1]} : vector<8x128xf32> to vector<8x8xf32>
      %63 = vector.shape_cast %61 : vector<8x128xf32> to vector<1x8x128xf32>
      %64 = vector.shape_cast %62 : vector<8x8xf32> to vector<8x8x1xf32>
      %65 = vector.broadcast %63 : vector<1x8x128xf32> to vector<8x8x128xf32>
      %66 = vector.broadcast %64 : vector<8x8x1xf32> to vector<8x8x128xf32>
      %67 = arith.addf %65, %66 : vector<8x8x128xf32>
      %cst_50 = arith.constant dense<0xFF800000> : vector<8x128xf32>
      %68 = vector.multi_reduction <maximumf>, %67, %cst_50 [1] : vector<8x8x128xf32> to vector<8x128xf32>
      %69 = tpu.iota {dimensions = array<i32: 1>} : vector<8x8x128xi32>
      %c0_i32_51 = arith.constant 0 : i32
      %70 = vector.broadcast %c0_i32_51 : i32 to vector<8x8x128xi32>
      %71 = arith.addi %69, %70 : vector<8x8x128xi32>
      %72 = vector.shape_cast %68 : vector<8x128xf32> to vector<8x1x128xf32>
      %73 = vector.broadcast %72 : vector<8x1x128xf32> to vector<8x8x128xf32>
      %74 = arith.cmpf oeq, %67, %73 : vector<8x8x128xf32>
      %c128_i32_52 = arith.constant 128 : i32
      %75 = vector.broadcast %c128_i32_52 : i32 to vector<8x8x128xi32>
      %76 = arith.select %74, %71, %75 : vector<8x8x128xi1>, vector<8x8x128xi32>
      %cst_53 = arith.constant dense<2147483647> : vector<8x128xi32>
      %77 = vector.multi_reduction <minsi>, %76, %cst_53 [1] : vector<8x8x128xi32> to vector<8x128xi32>
      %78 = arith.cmpf ogt, %68, %59 : vector<8x128xf32>
      %79 = arith.select %78, %77, %60 : vector<8x128xi1>, vector<8x128xi32>
      %80 = arith.select %78, %68, %59 : vector<8x128xi1>, vector<8x128xf32>
      %c8_54 = arith.constant 8 : index
      %c0_55 = arith.constant 0 : index
      %81 = vector.load %arg7[%c8_54, %c0_55] : memref<128x128xf32, #tpu.memory_space<vmem>>, vector<8x128xf32>
      %82 = vector.extract_strided_slice %arg18 {offsets = [0, 8], sizes = [8, 8], strides = [1, 1]} : vector<8x128xf32> to vector<8x8xf32>
      %83 = vector.shape_cast %81 : vector<8x128xf32> to vector<1x8x128xf32>
      %84 = vector.shape_cast %82 : vector<8x8xf32> to vector<8x8x1xf32>
      %85 = vector.broadcast %83 : vector<1x8x128xf32> to vector<8x8x128xf32>
      %86 = vector.broadcast %84 : vector<8x8x1xf32> to vector<8x8x128xf32>
      %87 = arith.addf %85, %86 : vector<8x8x128xf32>
      %cst_56 = arith.constant dense<0xFF800000> : vector<8x128xf32>
      %88 = vector.multi_reduction <maximumf>, %87, %cst_56 [1] : vector<8x8x128xf32> to vector<8x128xf32>
      %89 = tpu.iota {dimensions = array<i32: 1>} : vector<8x8x128xi32>
      %c8_i32_57 = arith.constant 8 : i32
      %90 = vector.broadcast %c8_i32_57 : i32 to vector<8x8x128xi32>
      %91 = arith.addi %89, %90 : vector<8x8x128xi32>
      %92 = vector.shape_cast %88 : vector<8x128xf32> to vector<8x1x128xf32>
      %93 = vector.broadcast %92 : vector<8x1x128xf32> to vector<8x8x128xf32>
      %94 = arith.cmpf oeq, %87, %93 : vector<8x8x128xf32>
      %c128_i32_58 = arith.constant 128 : i32
      %95 = vector.broadcast %c128_i32_58 : i32 to vector<8x8x128xi32>
      %96 = arith.select %94, %91, %95 : vector<8x8x128xi1>, vector<8x8x128xi32>
      %cst_59 = arith.constant dense<2147483647> : vector<8x128xi32>
      %97 = vector.multi_reduction <minsi>, %96, %cst_59 [1] : vector<8x8x128xi32> to vector<8x128xi32>
      %98 = arith.cmpf ogt, %88, %80 : vector<8x128xf32>
      %99 = arith.select %98, %97, %79 : vector<8x128xi1>, vector<8x128xi32>
      %100 = arith.select %98, %88, %80 : vector<8x128xi1>, vector<8x128xf32>
      %c0_i32_60 = arith.constant 0 : i32
      %101 = vector.shape_cast %58 : vector<8x1xi1> to vector<8x1xi1>
      %102 = vector.broadcast %101 : vector<8x1xi1> to vector<8x128xi1>
      %103 = vector.broadcast %c0_i32_60 : i32 to vector<8x128xi32>
      %104 = arith.select %102, %99, %103 : vector<8x128xi1>, vector<8x128xi32>
      %105 = arith.index_cast %52 : i32 to index
      %c0_61 = arith.constant 0 : index
      %106 = vector.load %arg16[%105, %c0_61] : memref<64x128xi32, #tpu.memory_space<vmem>>, vector<8x128xi32>
      tpu.vector_store %arg16[%105, %c0_61], %104 {strides = array<i32>} : memref<64x128xi32, #tpu.memory_space<vmem>>, vector<8x128xi32>,
      %107 = arith.addf %54, %100 : vector<8x128xf32>
      %108 = vector.shape_cast %58 : vector<8x1xi1> to vector<8x1xi1>
      %109 = vector.broadcast %108 : vector<8x1xi1> to vector<8x128xi1>
      %110 = arith.select %109, %107, %arg18 : vector<8x128xi1>, vector<8x128xf32>
      scf.yield %110 : vector<8x128xf32>
    }
    %c7_i32_29 = arith.constant 7 : i32
    %c0_30 = arith.constant 0 : index
    %c0_31 = arith.constant 0 : index
    %34 = vector.load %arg8[%c0_30, %c0_31] : memref<1x128xf32, #tpu.memory_space<vmem>>, vector<1x128xf32>
    %35 = vector.broadcast %34 : vector<1x128xf32> to vector<8x128xf32>
    %36 = arith.addf %33, %35 : vector<8x128xf32>
    %cst_32 = arith.constant dense<0xFF800000> : vector<8xf32>
    %37 = vector.multi_reduction <maximumf>, %36, %cst_32 [1] : vector<8x128xf32> to vector<8xf32>
    %38 = vector.shape_cast %37 : vector<8xf32> to vector<8x1xf32>
    %39 = vector.broadcast %38 : vector<8x1xf32> to vector<8x128xf32>
    %40 = arith.cmpf oeq, %36, %39 : vector<8x128xf32>
    %c128_i32 = arith.constant 128 : i32
    %41 = vector.broadcast %c128_i32 : i32 to vector<8x128xi32>
    %42 = arith.select %40, %27, %41 : vector<8x128xi1>, vector<8x128xi32>
    %cst_33 = arith.constant dense<2147483647> : vector<8xi32>
    %43 = vector.multi_reduction <minsi>, %42, %cst_33 [1] : vector<8x128xi32> to vector<8xi32>
    %44 = vector.shape_cast %43 : vector<8xi32> to vector<8x1xi32>
    %c56 = arith.constant 56 : index
    %c0_34 = arith.constant 0 : index
    %45 = vector.load %arg11[%c56, %c0_34] : memref<64x1xi32, #tpu.memory_space<vmem>>, vector<8x1xi32>
    tpu.vector_store %arg11[%c56, %c0_34], %44 {strides = array<i32>} : memref<64x1xi32, #tpu.memory_space<vmem>>, vector<8x1xi32>,
    %c0_35 = arith.constant 0 : index
    %c0_36 = arith.constant 0 : index
    %46 = vector.load %arg10[%c0_35, %c0_36] : memref<8x1xi32, #tpu.memory_space<vmem>>, vector<8x1xi32>
    %c1_i32_37 = arith.constant 1 : i32
    %47 = vector.broadcast %c1_i32_37 : i32 to vector<8x1xi32>
    %48 = arith.subi %46, %47 : vector<8x1xi32>
    %c0_i32_38 = arith.constant 0 : i32
    %c7_i32_39 = arith.constant 7 : i32
    %49 = arith.addi %c0_i32_38, %c7_i32_39 : i32
    %c1_i32_40 = arith.constant 1 : i32
    %50 = scf.for %arg17 = %c0_i32_38 to %49 step %c1_i32_40 iter_args(%arg18 = %44) -> (vector<8x1xi32>)  : i32 {
      %c6_i32 = arith.constant 6 : i32
      %51 = arith.subi %c6_i32, %arg17 : i32
      %c1_i32_42 = arith.constant 1 : i32
      %52 = arith.addi %51, %c1_i32_42 : i32
      %c8_i32_43 = arith.constant 8 : i32
      %53 = arith.muli %52, %c8_i32_43 : i32
      %54 = tpu.assume_multiple %53, 8 : i32
      %55 = arith.index_cast %54 : i32 to index
      %c0_44 = arith.constant 0 : index
      %56 = vector.load %arg16[%55, %c0_44] : memref<64x128xi32, #tpu.memory_space<vmem>>, vector<8x128xi32>
      %57 = vector.broadcast %arg18 : vector<8x1xi32> to vector<8x128xi32>
      %58 = arith.cmpi eq, %27, %57 : vector<8x128xi32>
      %c128_i32_45 = arith.constant 128 : i32
      %59 = vector.broadcast %c128_i32_45 : i32 to vector<8x128xi32>
      %60 = arith.select %58, %56, %59 : vector<8x128xi1>, vector<8x128xi32>
      %cst_46 = arith.constant dense<2147483647> : vector<8xi32>
      %61 = vector.multi_reduction <minsi>, %60, %cst_46 [1] : vector<8x128xi32> to vector<8xi32>
      %62 = vector.shape_cast %61 : vector<8xi32> to vector<8x1xi32>
      %63 = vector.broadcast %51 : i32 to vector<8x1xi32>
      %64 = arith.cmpi eq, %48, %63 : vector<8x1xi32>
      %65 = arith.select %64, %arg18, %62 : vector<8x1xi1>, vector<8x1xi32>
      %c8_i32_47 = arith.constant 8 : i32
      %66 = arith.muli %51, %c8_i32_47 : i32
      %67 = tpu.assume_multiple %66, 8 : i32
      %68 = arith.index_cast %67 : i32 to index
      %c0_48 = arith.constant 0 : index
      %69 = vector.load %arg11[%68, %c0_48] : memref<64x1xi32, #tpu.memory_space<vmem>>, vector<8x1xi32>
      tpu.vector_store %arg11[%68, %c0_48], %65 {strides = array<i32>} : memref<64x1xi32, #tpu.memory_space<vmem>>, vector<8x1xi32>,
      scf.yield %65 : vector<8x1xi32>
    }
    %c7_i32_41 = arith.constant 7 : i32
    return
  }
  func.func @transform_0(%arg0: i32) -> (i32, i32) {
    %c0_i32 = arith.constant 0 : i32
    %c0_i32_0 = arith.constant 0 : i32
    %c0_i32_1 = arith.constant 0 : i32
    return %c0_i32, %c0_i32_0 : i32, i32
  }
  func.func @transform_1(%arg0: i32) -> (i32, i32) {
    %c0_i32 = arith.constant 0 : i32
    %c0_i32_0 = arith.constant 0 : i32
    %c0_i32_1 = arith.constant 0 : i32
    return %c0_i32, %c0_i32_0 : i32, i32
  }
  func.func @transform_2(%arg0: i32) -> (i32, i32) {
    %c0_i32 = arith.constant 0 : i32
    %c0_i32_0 = arith.constant 0 : i32
    %c0_i32_1 = arith.constant 0 : i32
    return %c0_i32, %c0_i32_0 : i32, i32
  }
  func.func @transform_3(%arg0: i32) -> (i32, i32) {
    %c0_i32 = arith.constant 0 : i32
    %c0_i32_0 = arith.constant 0 : i32
    %c0_i32_1 = arith.constant 0 : i32
    return %c0_i32, %c0_i32_0 : i32, i32
  }
  func.func @transform_4(%arg0: i32) -> (i32, i32) {
    %c0_i32 = arith.constant 0 : i32
    %c0_i32_0 = arith.constant 0 : i32
    %c0_i32_1 = arith.constant 0 : i32
    return %c0_i32, %c0_i32_0 : i32, i32
  }
  func.func @transform_5(%arg0: i32) -> (i32, i32) {
    %c0_i32 = arith.constant 0 : i32
    %c0_i32_0 = arith.constant 0 : i32
    %c0_i32_1 = arith.constant 0 : i32
    return %c0_i32, %c0_i32_0 : i32, i32
  }
  func.func @transform_6(%arg0: i32) -> (i32, i32) {
    %c0_i32 = arith.constant 0 : i32
    %c0_i32_0 = arith.constant 0 : i32
    %c0_i32_1 = arith.constant 0 : i32
    return %c0_i32, %c0_i32_0 : i32, i32
  }
  func.func @transform_7(%arg0: i32) -> (i32, i32) {
    %c0_i32 = arith.constant 0 : i32
    %c0_i32_0 = arith.constant 0 : i32
    %c0_i32_1 = arith.constant 0 : i32
    return %c0_i32, %c0_i32_0 : i32, i32
  }
  func.func @transform_8(%arg0: i32) -> (i32, i32) {
    %c0_i32 = arith.constant 0 : i32
    %c0_i32_0 = arith.constant 0 : i32
    %c0_i32_1 = arith.constant 0 : i32
    return %c0_i32, %c0_i32_0 : i32, i32
  }
  func.func @transform_9(%arg0: i32) -> (i32, i32) {
    %c0_i32 = arith.constant 0 : i32
    %c0_i32_0 = arith.constant 0 : i32
    %c0_i32_1 = arith.constant 0 : i32
    return %c0_i32, %c0_i32_0 : i32, i32
  }
  func.func @transform_10(%arg0: i32) -> (i32, i32) {
    %c0_i32 = arith.constant 0 : i32
    %c0_i32_0 = arith.constant 0 : i32
    %c0_i32_1 = arith.constant 0 : i32
    return %c0_i32, %c0_i32_0 : i32, i32
  }
}

</mosaic_0001>

<llo_original>
// kernel: bilstm_crf_forward.1
$region0: #{bilstm_crf_forward.1}
  #allocation0 [shape = 'u32[]', space=smem, size = 0x4, offset = 0x4, fixed_abs, tag = 'smem constant byte address 0x4 - core index']
  #allocation1 [shape = 'u32[72,128]{1,0:T(1,128)}', space=vmem, size = 0x9000, scoped, tag = 'internal scratch']
  #allocation2 [shape = 'f32[64,128]{1,0:T(8,128)}', space=vmem, size = 0x8000, scoped, tag = 'scratch operand']
  #allocation3 [shape = 'f32[64,16]{1,0:T(8,128)}', space=vmem, size = 0x8000, scoped, tag = 'scratch operand']
  #allocation4 [shape = 'f32[64,16]{1,0:T(8,128)}', space=vmem, size = 0x8000, scoped, tag = 'scratch operand']
  #allocation5 [shape = 'f32[64,128]{1,0:T(8,128)}', space=vmem, size = 0x8000, scoped, tag = 'scratch operand']
  #allocation6 [shape = 's32[64,128]{1,0:T(8,128)}', space=vmem, size = 0x8000, scoped, tag = 'scratch operand']
  %s0 = inlined_call_operand.vmem [shape: bf16[64,64], index: 0, kind: input, shape index: {}]
  %s1 = inlined_call_operand.vmem [shape: bf16[64,128], index: 1, kind: input, shape index: {}]
  %s2 = inlined_call_operand.vmem [shape: f32[1,128], index: 2, kind: input, shape index: {}]
  %s3 = inlined_call_operand.vmem [shape: bf16[32,128], index: 3, kind: input, shape index: {}]
  %s4 = inlined_call_operand.vmem [shape: bf16[32,128], index: 4, kind: input, shape index: {}]
  %s5 = inlined_call_operand.vmem [shape: f32[1,128], index: 5, kind: input, shape index: {}]
  %s6 = inlined_call_operand.vmem [shape: f32[128,128], index: 6, kind: input, shape index: {}]
  %s7 = inlined_call_operand.vmem [shape: f32[1,128], index: 7, kind: input, shape index: {}]
  %s8 = inlined_call_operand.vmem [shape: f32[64,2], index: 8, kind: input, shape index: {}]
  %s9 = inlined_call_operand.vmem [shape: s32[8,1], index: 9, kind: input, shape index: {}]
  %s10 = inlined_call_operand.vmem [shape: s32[64,1], index: 10, kind: output, shape index: {}]
  %s11 = sld [smem:[#allocation0]]
  $region71: #{bilstm_crf_forward.1} parent=0
    _
  %s13 = ssub.s32 1, %s11
  %s14 = scalar_select 0, %s13, %s11
  // Predicated region
  $region2: #{bilstm_crf_forward.1} parent=0 // pred_check
    _
  $region3: #{bilstm_crf_forward.1} parent=0 // pred_check_branch
    %16 = sbr.rel (0) target = $region5
  $region4: #{bilstm_crf_forward.1} parent=0 // pred_region
    _
  $region5: #{bilstm_crf_forward.1} parent=0 // pred_fallthru
    _
  // Predicated region
  $region6: #{bilstm_crf_forward.1} parent=0 // pred_check
    _
  $region7: #{bilstm_crf_forward.1} parent=0 // pred_check_branch
    %18 = sbr.rel (0) target = $region9
  $region8: #{bilstm_crf_forward.1} parent=0 // pred_region
    _
  $region9: #{bilstm_crf_forward.1} parent=0 // pred_fallthru
    _
  // Predicated region
  $region10: #{bilstm_crf_forward.1} parent=0 // pred_check
    _
  $region11: #{bilstm_crf_forward.1} parent=0 // pred_check_branch
    %20 = sbr.rel (0) target = $region13
  $region12: #{bilstm_crf_forward.1} parent=0 // pred_region
    _
  $region13: #{bilstm_crf_forward.1} parent=0 // pred_fallthru
    _
  // Predicated region
  $region14: #{bilstm_crf_forward.1} parent=0 // pred_check
    _
  $region15: #{bilstm_crf_forward.1} parent=0 // pred_check_branch
    %22 = sbr.rel (0) target = $region17
  $region16: #{bilstm_crf_forward.1} parent=0 // pred_region
    _
  $region17: #{bilstm_crf_forward.1} parent=0 // pred_fallthru
    _
  // Predicated region
  $region18: #{bilstm_crf_forward.1} parent=0 // pred_check
    _
  $region19: #{bilstm_crf_forward.1} parent=0 // pred_check_branch
    %24 = sbr.rel (0) target = $region21
  $region20: #{bilstm_crf_forward.1} parent=0 // pred_region
    _
  $region21: #{bilstm_crf_forward.1} parent=0 // pred_fallthru
    _
  // Predicated region
  $region22: #{bilstm_crf_forward.1} parent=0 // pred_check
    _
  $region23: #{bilstm_crf_forward.1} parent=0 // pred_check_branch
    %26 = sbr.rel (0) target = $region25
  $region24: #{bilstm_crf_forward.1} parent=0 // pred_region
    _
  $region25: #{bilstm_crf_forward.1} parent=0 // pred_fallthru
    _
  // Predicated region
  $region26: #{bilstm_crf_forward.1} parent=0 // pred_check
    _
  $region27: #{bilstm_crf_forward.1} parent=0 // pred_check_branch
    %28 = sbr.rel (0) target = $region29
  $region28: #{bilstm_crf_forward.1} parent=0 // pred_region
    _
  $region29: #{bilstm_crf_forward.1} parent=0 // pred_fallthru
    _
  // Predicated region
  $region30: #{bilstm_crf_forward.1} parent=0 // pred_check
    _
  $region31: #{bilstm_crf_forward.1} parent=0 // pred_check_branch
    %30 = sbr.rel (0) target = $region33
  $region32: #{bilstm_crf_forward.1} parent=0 // pred_region
    _
  $region33: #{bilstm_crf_forward.1} parent=0 // pred_fallthru
    _
  // Predicated region
  $region34: #{bilstm_crf_forward.1} parent=0 // pred_check
    _
  $region35: #{bilstm_crf_forward.1} parent=0 // pred_check_branch
    %32 = sbr.rel (0) target = $region37
  $region36: #{bilstm_crf_forward.1} parent=0 // pred_region
    _
  $region37: #{bilstm_crf_forward.1} parent=0 // pred_fallthru
    _
  // Predicated region
  $region38: #{bilstm_crf_forward.1} parent=0 // pred_check
    _
  $region39: #{bilstm_crf_forward.1} parent=0 // pred_check_branch
    %34 = sbr.rel (0) target = $region41
  $region40: #{bilstm_crf_forward.1} parent=0 // pred_region
    _
  $region41: #{bilstm_crf_forward.1} parent=0 // pred_fallthru
    _
  %v36 = vld [vmem:[%s0] sm:$0xf]
  %v37 = vld [vmem:[%s0 + $0x4] sm:$0xf]
  %v38 = vld [vmem:[%s0 + $0x8] sm:$0xf]
  %v39 = vld [vmem:[%s0 + $0xc] sm:$0xf]
  %v40 = vld [vmem:[%s0 + $0x10] sm:$0xf]
  %v41 = vld [vmem:[%s0 + $0x14] sm:$0xf]
  %v42 = vld [vmem:[%s0 + $0x18] sm:$0xf]
  %v43 = vld [vmem:[%s0 + $0x1c] sm:$0xf]
  %v44 = vld [vmem:[%s1] sm:$0xf]
  %v45 = vld [vmem:[%s1 + $0x4] sm:$0xf]
  %v46 = vld [vmem:[%s1 + $0x8] sm:$0xf]
  %v47 = vld [vmem:[%s1 + $0xc] sm:$0xf]
  %v48 = vld [vmem:[%s1 + $0x10] sm:$0xf]
  %v49 = vld [vmem:[%s1 + $0x14] sm:$0xf]
  %v50 = vld [vmem:[%s1 + $0x18] sm:$0xf]
  %v51 = vld [vmem:[%s1 + $0x1c] sm:$0xf]
  %v52 = vld [vmem:[%s2] sm:$0x1]
  %v54 = vperm.slane %v52, 0
  %v64 = vunpack.c.l.b16 %v36
  %v65 = vunpack.c.l.b16 %v37
  %v66 = vunpack.c.l.b16 %v38
  %v67 = vunpack.c.l.b16 %v39
  %v68 = vunpack.c.l.b16 %v40
  %v69 = vunpack.c.l.b16 %v41
  %v70 = vunpack.c.l.b16 %v42
  %v71 = vunpack.c.l.b16 %v43
  %v72 = vpack.c.b16 %v65, %v64
  %v73 = vpack.c.b16 %v67, %v66
  %v74 = vpack.c.b16 %v69, %v68
  %v75 = vpack.c.b16 %v71, %v70
  %v84 = vunpack.c.l.b16 %v44
  %v85 = vunpack.c.l.b16 %v45
  %v86 = vunpack.c.l.b16 %v46
  %v87 = vunpack.c.l.b16 %v47
  %v88 = vunpack.c.l.b16 %v48
  %v89 = vunpack.c.l.b16 %v49
  %v90 = vunpack.c.l.b16 %v50
  %v91 = vunpack.c.l.b16 %v51
  %v92 = vpack.c.b16 %v85, %v84
  %v93 = vpack.c.b16 %v87, %v86
  %v94 = vpack.c.b16 %v89, %v88
  %v95 = vpack.c.b16 %v91, %v90
  %vm100 = vcmask 523264
  %v102 = vsel %vm100, %v72, 0
  %v105 = vsel %vm100, %v73, 0
  %v108 = vsel %vm100, %v74, 0
  %v111 = vsel %vm100, %v75, 0
  %113 = vmatpush.bf16.msra.mxu0 0
  %114 = vmatpush.bf16.msra.mxu0 0
  %115 = vmatpush.bf16.msra.mxu0 0
  %116 = vmatpush.bf16.msra.mxu0 0
  %117 = vmatpush.bf16.msra.mxu0 %v95
  %118 = vmatpush.bf16.msra.mxu0 %v94
  %119 = vmatpush.bf16.msra.mxu0 %v93
  %120 = vmatpush.bf16.msra.mxu0 %v92
  %121 = vmatmul.bf16.gmra.mxu0 %v102
  %v122 = vpop.f32.mrf.mxu0
  %v123 = vadd.f32 %v54, %v122
  %v124 = vpop.f32.mrf.mxu0
  %v125 = vadd.f32 %v54, %v124
  %126 = vmatmul.bf16.gmra.mxu0 %v105
  %v127 = vpop.f32.mrf.mxu0
  %v128 = vadd.f32 %v54, %v127
  %v129 = vpop.f32.mrf.mxu0
  %v130 = vadd.f32 %v54, %v129
  %131 = vmatmul.bf16.gmra.mxu0 %v108
  %v132 = vpop.f32.mrf.mxu0
  %v133 = vadd.f32 %v54, %v132
  %v134 = vpop.f32.mrf.mxu0
  %v135 = vadd.f32 %v54, %v134
  %136 = vmatmul.bf16.gmra.mxu0 %v111
  %v137 = vpop.f32.mrf.mxu0
  %v138 = vadd.f32 %v54, %v137
  %v139 = vpop.f32.mrf.mxu0
  %v140 = vadd.f32 %v54, %v139
  %141 = vdwg.mxu0
  %142 = vst [vmem:[#allocation2] sm:$0xff] %v123
  %143 = vst [vmem:[#allocation2 + $0x8] sm:$0xff] %v125
  %144 = vst [vmem:[#allocation2 + $0x10] sm:$0xff] %v128
  %145 = vst [vmem:[#allocation2 + $0x18] sm:$0xff] %v130
  %146 = vst [vmem:[#allocation2 + $0x20] sm:$0xff] %v133
  %147 = vst [vmem:[#allocation2 + $0x28] sm:$0xff] %v135
  %148 = vst [vmem:[#allocation2 + $0x30] sm:$0xff] %v138
  %149 = vst [vmem:[#allocation2 + $0x38] sm:$0xff] %v140
  %v150 = vld [vmem:[%s3] sm:$0xf]
  %v151 = vld [vmem:[%s3 + $0x4] sm:$0xf]
  %v152 = vld [vmem:[%s3 + $0x8] sm:$0xf]
  %v153 = vld [vmem:[%s3 + $0xc] sm:$0xf]
  %v154 = vlaneseq
  %v155 = vand.u32 %v154, 127
  %vm156 = vcmp.lt.s32.totalorder %v155, 16
  loop: start=0, step=1, limit=8
  $region42: #{bilstm_crf_forward.1} parent=0 // loop_pre_header
    _
  $region43: #{bilstm_crf_forward.1} parent=0 // loop_header
    %s158 = sphi 0, %s162
    %p159 = scmp.ge.s32.totalorder %s158, 8
    %v163 = vphi 0.0, %v276
    %v164 = vphi 0.0, %v283
  $region44: #{bilstm_crf_forward.1} parent=0 // loop_header_branch
    %161 = sbr.rel (%p159) target = $region48
  $region45: #{bilstm_crf_forward.1} parent=0 // loop_body
    %s165 = smul.u32 %s158, 8
    %s166 = ssub.s32 7, %s158
    %s167 = smul.u32 %s166, 8
    %s168 = scalar_lea.vmem [#allocation2], %s165
    %v169 = vld [vmem:[%s168] sm:$0xff]
    %s170 = scalar_lea.vmem %s8, %s165
    %v171 = vld [vmem:[%s170] sm:$0xff]
    %v172 = vpack.c.bf16 %v163, %v163
    %v177 = vunpack.c.l.b16 %v150
    %v178 = vunpack.c.l.b16 %v151
    %v179 = vunpack.c.l.b16 %v152
    %v180 = vunpack.c.l.b16 %v153
    %v181 = vpack.c.b16 %v178, %v177
    %v182 = vpack.c.b16 %v180, %v179
    %vm185 = vcmask 261120
    %v187 = vsel %vm185, %v172, 0
    %189 = vmatpush.bf16.msra.mxu0 0
    %190 = vmatpush.bf16.msra.mxu0 0
    %191 = vmatpush.bf16.msra.mxu0 0
    %192 = vmatpush.bf16.msra.mxu0 0
    %193 = vmatpush.bf16.msra.mxu0 0
    %194 = vmatpush.bf16.msra.mxu0 0
    %195 = vmatpush.bf16.msra.mxu0 %v182
    %196 = vmatpush.bf16.msra.mxu0 %v181
    %197 = vmatmul.bf16.gmra.mxu0 %v187
    %v198 = vpop.f32.mrf.mxu0
    %v199 = vadd.f32 0.0, %v198
    %v200 = vpop.f32.mrf.mxu0
    %201 = vdwg.mxu0
    %v202 = vadd.f32 %v169, %v199
    %v203 = vxor.u32 %v202, 2147483648
    %v204 = vmul.f32 %v203, 1.442695
    %v205 = vpow.pop %v204
    %v206 = vadd.f32 %v205, 1.0
    %v207 = vrcp.pop %v206
    %v208 = vmul.f32 %v206, %v207
    %v209 = vsub.f32 1.0, %v208
    %v210 = vmul.f32 %v207, %v209
    %v211 = vadd.f32 %v207, %v210
    %vm212 = vweird.f32 %v206
    %vm213 = vweird.f32 %v207
    %vm214 = vmor %vm212, %vm213
    %v215 = vsel %vm214, %v207, %v211
    %v216 = vand.u32 2147483647, %v206
    %vm217 = vcmp.eq.f32.partialorder %v216, 8.507059e+37
    %v218 = vand.u32 %v206, 2147483648
    %v219 = vor.u32 1.1754944e-38, %v218
    %v220 = vsel %vm217, %v219, %v215
    %v221 = vmul.f32 1.0, %v220
    %v222 = vtanh.pop %v202
    %224 = vrot.lane.b32.xlu0 %v164, 32
    %v225 = vpop.permute.xlu0 %224
    %v227 = vmul.f32 %v221, %v225
    %229 = vrot.lane.b32.xlu0 %v222, 64
    %v230 = vpop.permute.xlu0 %229
    %v232 = vmul.f32 %v221, %v230
    %234 = vrot.lane.b32.xlu0 %v232, 32
    %v235 = vpop.permute.xlu0 %234
    %v237 = vadd.f32 %v227, %v235
    %v238 = vtanh.pop %v237
    %240 = vrot.lane.b32.xlu0 %v238, 64
    %v241 = vpop.permute.xlu0 %240
    %v243 = vmul.f32 %v221, %v241
    %245 = vset.pattern.permute.xlu0 0
    %246 = vperm.xlu0 %245, %v171
    %v247 = vpop.permute.xlu0 %246
    %v249 = vmul.f32 %v243, %v247
    %251 = vrot.lane.b32.xlu0 %v249, 32
    %v252 = vpop.permute.xlu0 %251
    %s254 = scalar_lea.vmem [#allocation3], %s165
    %vm255 = vcmask 130048
    %256 = vst.msk [vmem:[%s254] sm:$0xff] %vm255, %v252
    %257 = vset.pattern.permute.xlu0 1
    %258 = vperm.xlu0 %257, %v171
    %v259 = vpop.permute.xlu0 %258
    %v261 = vmul.f32 %v243, %v259
    %263 = vrot.lane.b32.xlu0 %v261, 16
    %v264 = vpop.permute.xlu0 %263
    %s266 = scalar_lea.vmem [#allocation4], %s167
    %267 = vst.msk [vmem:[%s266] sm:$0xff] %vm255, %v264
    %v268 = vsel %vm156, %v247, %v259
    %270 = vrot.lane.b32.xlu0 %v243, 32
    %v271 = vpop.permute.xlu0 %270
    %v273 = vmul.f32 %v268, %v271
    %v274 = vsub.f32 1.0, %v268
    %v275 = vmul.f32 %v274, %v163
    %v276 = vadd.f32 %v273, %v275
    %278 = vrot.lane.b32.xlu0 %v237, 96
    %v279 = vpop.permute.xlu0 %278
    %v281 = vmul.f32 %v268, %v279
    %v282 = vmul.f32 %v274, %v164
    %v283 = vadd.f32 %v281, %v282
  $region46: #{bilstm_crf_forward.1} parent=0 // loop_footer
    %s162 = sadd.s32 1, %s158
  $region47: #{bilstm_crf_forward.1} parent=0 // loop_footer_branch
    %157 = sbr.rel target = $region43
  $region48: #{bilstm_crf_forward.1} parent=0 // loop_exit
    _
  %v284 = vld [vmem:[#allocation3] sm:$0xff]
  %v285 = vld [vmem:[#allocation3 + $0x8] sm:$0xff]
  %v286 = vld [vmem:[#allocation3 + $0x10] sm:$0xff]
  %v287 = vld [vmem:[#allocation3 + $0x18] sm:$0xff]
  %v288 = vld [vmem:[#allocation3 + $0x20] sm:$0xff]
  %v289 = vld [vmem:[#allocation3 + $0x28] sm:$0xff]
  %v290 = vld [vmem:[#allocation3 + $0x30] sm:$0xff]
  %v291 = vld [vmem:[#allocation3 + $0x38] sm:$0xff]
  %v292 = vpack.c.bf16 %v285, %v284
  %v293 = vpack.c.bf16 %v287, %v286
  %v294 = vpack.c.bf16 %v289, %v288
  %v295 = vpack.c.bf16 %v291, %v290
  %v296 = vld [vmem:[%s4] sm:$0xf]
  %v297 = vld [vmem:[%s4 + $0x4] sm:$0xf]
  %v298 = vld [vmem:[#allocation4] sm:$0xff]
  %v299 = vld [vmem:[#allocation4 + $0x8] sm:$0xff]
  %v300 = vld [vmem:[#allocation4 + $0x10] sm:$0xff]
  %v301 = vld [vmem:[#allocation4 + $0x18] sm:$0xff]
  %v302 = vld [vmem:[#allocation4 + $0x20] sm:$0xff]
  %v303 = vld [vmem:[#allocation4 + $0x28] sm:$0xff]
  %v304 = vld [vmem:[#allocation4 + $0x30] sm:$0xff]
  %v305 = vld [vmem:[#allocation4 + $0x38] sm:$0xff]
  %v306 = vpack.c.bf16 %v299, %v298
  %v307 = vpack.c.bf16 %v301, %v300
  %v308 = vpack.c.bf16 %v303, %v302
  %v309 = vpack.c.bf16 %v305, %v304
  %v310 = vld [vmem:[%s4 + $0x8] sm:$0xf]
  %v311 = vld [vmem:[%s4 + $0xc] sm:$0xf]
  %v314 = vunpack.c.l.b16 %v310
  %v315 = vunpack.c.l.b16 %v311
  %v316 = vpack.c.b16 %v315, %v314
  %vm318 = vcmask 130048
  %v320 = vsel %vm318, %v306, 0
  %v323 = vsel %vm318, %v307, 0
  %v326 = vsel %vm318, %v308, 0
  %v329 = vsel %vm318, %v309, 0
  %331 = vmatpush.bf16.msra.mxu0 0
  %332 = vmatpush.bf16.msra.mxu0 0
  %333 = vmatpush.bf16.msra.mxu0 0
  %334 = vmatpush.bf16.msra.mxu0 0
  %335 = vmatpush.bf16.msra.mxu0 0
  %336 = vmatpush.bf16.msra.mxu0 0
  %337 = vmatpush.bf16.msra.mxu0 0
  %338 = vmatpush.bf16.msra.mxu0 %v316
  %339 = vmatmul.bf16.gmra.mxu0 %v320
  %v340 = vpop.f32.mrf.mxu0
  %v341 = vadd.f32 0.0, %v340
  %v342 = vpop.f32.mrf.mxu0
  %v343 = vadd.f32 0.0, %v342
  %344 = vmatmul.bf16.gmra.mxu0 %v323
  %v345 = vpop.f32.mrf.mxu0
  %v346 = vadd.f32 0.0, %v345
  %v347 = vpop.f32.mrf.mxu0
  %v348 = vadd.f32 0.0, %v347
  %349 = vmatmul.bf16.gmra.mxu0 %v326
  %v350 = vpop.f32.mrf.mxu0
  %v351 = vadd.f32 0.0, %v350
  %v352 = vpop.f32.mrf.mxu0
  %v353 = vadd.f32 0.0, %v352
  %354 = vmatmul.bf16.gmra.mxu0 %v329
  %v355 = vpop.f32.mrf.mxu0
  %v356 = vadd.f32 0.0, %v355
  %v357 = vpop.f32.mrf.mxu0
  %v358 = vadd.f32 0.0, %v357
  %359 = vdwg.mxu0
  %v362 = vunpack.c.l.b16 %v296
  %v363 = vunpack.c.l.b16 %v297
  %v364 = vpack.c.b16 %v363, %v362
  %v367 = vsel %vm318, %v292, 0
  %v370 = vsel %vm318, %v293, 0
  %v373 = vsel %vm318, %v294, 0
  %v376 = vsel %vm318, %v295, 0
  %378 = vmatpush.bf16.msra.mxu0 0
  %379 = vmatpush.bf16.msra.mxu0 0
  %380 = vmatpush.bf16.msra.mxu0 0
  %381 = vmatpush.bf16.msra.mxu0 0
  %382 = vmatpush.bf16.msra.mxu0 0
  %383 = vmatpush.bf16.msra.mxu0 0
  %384 = vmatpush.bf16.msra.mxu0 0
  %385 = vmatpush.bf16.msra.mxu0 %v364
  %386 = vmatmul.bf16.gmra.mxu0 %v367
  %v387 = vpop.f32.mrf.mxu0
  %v388 = vadd.f32 %v341, %v387
  %v389 = vpop.f32.mrf.mxu0
  %v390 = vadd.f32 %v343, %v389
  %391 = vmatmul.bf16.gmra.mxu0 %v370
  %v392 = vpop.f32.mrf.mxu0
  %v393 = vadd.f32 %v346, %v392
  %v394 = vpop.f32.mrf.mxu0
  %v395 = vadd.f32 %v348, %v394
  %396 = vmatmul.bf16.gmra.mxu0 %v373
  %v397 = vpop.f32.mrf.mxu0
  %v398 = vadd.f32 %v351, %v397
  %v399 = vpop.f32.mrf.mxu0
  %v400 = vadd.f32 %v353, %v399
  %401 = vmatmul.bf16.gmra.mxu0 %v376
  %v402 = vpop.f32.mrf.mxu0
  %v403 = vadd.f32 %v356, %v402
  %v404 = vpop.f32.mrf.mxu0
  %v405 = vadd.f32 %v358, %v404
  %406 = vdwg.mxu0
  %v407 = vld [vmem:[%s5] sm:$0x1]
  %v409 = vperm.slane %v407, 0
  %v411 = vadd.f32 %v388, %v409
  %v412 = vadd.f32 %v390, %v409
  %v413 = vadd.f32 %v393, %v409
  %v414 = vadd.f32 %v395, %v409
  %v415 = vadd.f32 %v398, %v409
  %v416 = vadd.f32 %v400, %v409
  %v417 = vadd.f32 %v403, %v409
  %v418 = vadd.f32 %v405, %v409
  %419 = vst [vmem:[#allocation5] sm:$0xff] %v411
  %420 = vst [vmem:[#allocation5 + $0x8] sm:$0xff] %v412
  %421 = vst [vmem:[#allocation5 + $0x10] sm:$0xff] %v413
  %422 = vst [vmem:[#allocation5 + $0x18] sm:$0xff] %v414
  %423 = vst [vmem:[#allocation5 + $0x20] sm:$0xff] %v415
  %424 = vst [vmem:[#allocation5 + $0x28] sm:$0xff] %v416
  %425 = vst [vmem:[#allocation5 + $0x30] sm:$0xff] %v417
  %426 = vst [vmem:[#allocation5 + $0x38] sm:$0xff] %v418
  %v427 = vld [vmem:[#allocation5] sm:$0xff]
  %v428 = vld [vmem:[%s6 + $0x8] sm:$0x1]
  %v429 = vperm.slane %v428, 0
  %v430 = vadd.f32 %v427, %v429
  loop: start=1, step=1, limit=8
  $region49: #{bilstm_crf_forward.1} parent=0 // loop_pre_header
    _
  $region50: #{bilstm_crf_forward.1} parent=0 // loop_header
    %s432 = sphi 1, %s436
    %p433 = scmp.ge.s32.totalorder %s432, 8
    %v437 = vphi %v430, %v928
  $region51: #{bilstm_crf_forward.1} parent=0 // loop_header_branch
    %435 = sbr.rel (%p433) target = $region55
  $region52: #{bilstm_crf_forward.1} parent=0 // loop_body
    %s438 = smul.u32 %s432, 8
    %s439 = scalar_lea.vmem [#allocation5], %s438
    %v440 = vld [vmem:[%s439] sm:$0xff]
    %s441 = scalar_lea.vmem %s8, %s438
    %v442 = vld [vmem:[%s441] sm:$0xff]
    %vm443 = vcmp.gt.f32.partialorder %v442, 0.0
    %v444 = vld [vmem:[%s6] sm:$0xff]
    %v445 = vperm.slane %v437, 0
    %v446 = vlaneseq
    %v447 = vshrl.u32 %v446, 7
    %449 = vset.pattern.permute.xlu0 %v447
    %450 = vperm.xlu0 %449, %v445
    %v451 = vpop.permute.xlu0 %450
    %v452 = vperm.slane %v437, 1
    %v453 = vlaneseq
    %v454 = vshrl.u32 %v453, 7
    %456 = vset.pattern.permute.xlu0 %v454
    %457 = vperm.xlu0 %456, %v452
    %v458 = vpop.permute.xlu0 %457
    %v459 = vperm.slane %v437, 2
    %v460 = vlaneseq
    %v461 = vshrl.u32 %v460, 7
    %463 = vset.pattern.permute.xlu0 %v461
    %464 = vperm.xlu0 %463, %v459
    %v465 = vpop.permute.xlu0 %464
    %v466 = vperm.slane %v437, 3
    %v467 = vlaneseq
    %v468 = vshrl.u32 %v467, 7
    %470 = vset.pattern.permute.xlu0 %v468
    %471 = vperm.xlu0 %470, %v466
    %v472 = vpop.permute.xlu0 %471
    %v473 = vperm.slane %v437, 4
    %v474 = vlaneseq
    %v475 = vshrl.u32 %v474, 7
    %477 = vset.pattern.permute.xlu0 %v475
    %478 = vperm.xlu0 %477, %v473
    %v479 = vpop.permute.xlu0 %478
    %v480 = vperm.slane %v437, 5
    %v481 = vlaneseq
    %v482 = vshrl.u32 %v481, 7
    %484 = vset.pattern.permute.xlu0 %v482
    %485 = vperm.xlu0 %484, %v480
    %v486 = vpop.permute.xlu0 %485
    %v487 = vperm.slane %v437, 6
    %v488 = vlaneseq
    %v489 = vshrl.u32 %v488, 7
    %491 = vset.pattern.permute.xlu0 %v489
    %492 = vperm.xlu0 %491, %v487
    %v493 = vpop.permute.xlu0 %492
    %v494 = vperm.slane %v437, 7
    %v495 = vlaneseq
    %v496 = vshrl.u32 %v495, 7
    %498 = vset.pattern.permute.xlu0 %v496
    %499 = vperm.xlu0 %498, %v494
    %v500 = vpop.permute.xlu0 %499
    %v501 = vadd.f32 %v444, %v451
    %v502 = vadd.f32 %v444, %v458
    %v503 = vadd.f32 %v444, %v465
    %v504 = vadd.f32 %v444, %v472
    %v505 = vadd.f32 %v444, %v479
    %v506 = vadd.f32 %v444, %v486
    %v507 = vadd.f32 %v444, %v493
    %v508 = vadd.f32 %v444, %v500
    %v509 = vrot.slane %v501, 4
    %v510 = vmax.f32 %v501, %v509
    %v511 = vrot.slane %v510, 2
    %v512 = vmax.f32 %v510, %v511
    %v513 = vrot.slane %v512, 1
    %v514 = vmax.f32 %v512, %v513
    %v515 = vrot.slane %v502, 4
    %v516 = vmax.f32 %v502, %v515
    %v517 = vrot.slane %v516, 2
    %v518 = vmax.f32 %v516, %v517
    %v519 = vrot.slane %v518, 1
    %v520 = vmax.f32 %v518, %v519
    %v521 = vrot.slane %v503, 4
    %v522 = vmax.f32 %v503, %v521
    %v523 = vrot.slane %v522, 2
    %v524 = vmax.f32 %v522, %v523
    %v525 = vrot.slane %v524, 1
    %v526 = vmax.f32 %v524, %v525
    %v527 = vrot.slane %v504, 4
    %v528 = vmax.f32 %v504, %v527
    %v529 = vrot.slane %v528, 2
    %v530 = vmax.f32 %v528, %v529
    %v531 = vrot.slane %v530, 1
    %v532 = vmax.f32 %v530, %v531
    %v533 = vrot.slane %v505, 4
    %v534 = vmax.f32 %v505, %v533
    %v535 = vrot.slane %v534, 2
    %v536 = vmax.f32 %v534, %v535
    %v537 = vrot.slane %v536, 1
    %v538 = vmax.f32 %v536, %v537
    %v539 = vrot.slane %v506, 4
    %v540 = vmax.f32 %v506, %v539
    %v541 = vrot.slane %v540, 2
    %v542 = vmax.f32 %v540, %v541
    %v543 = vrot.slane %v542, 1
    %v544 = vmax.f32 %v542, %v543
    %v545 = vrot.slane %v507, 4
    %v546 = vmax.f32 %v507, %v545
    %v547 = vrot.slane %v546, 2
    %v548 = vmax.f32 %v546, %v547
    %v549 = vrot.slane %v548, 1
    %v550 = vmax.f32 %v548, %v549
    %v551 = vrot.slane %v508, 4
    %v552 = vmax.f32 %v508, %v551
    %v553 = vrot.slane %v552, 2
    %v554 = vmax.f32 %v552, %v553
    %v555 = vrot.slane %v554, 1
    %v556 = vmax.f32 %v554, %v555
    %v557 = vlaneseq
    %v558 = vshrl.u32 %v557, 7
    %vm559 = vcmp.eq.f32.partialorder %v501, %v514
    %vm560 = vcmp.eq.f32.partialorder %v502, %v520
    %vm561 = vcmp.eq.f32.partialorder %v503, %v526
    %vm562 = vcmp.eq.f32.partialorder %v504, %v532
    %vm563 = vcmp.eq.f32.partialorder %v505, %v538
    %vm564 = vcmp.eq.f32.partialorder %v506, %v544
    %vm565 = vcmp.eq.f32.partialorder %v507, %v550
    %vm566 = vcmp.eq.f32.partialorder %v508, %v556
    %v567 = vsel %vm559, %v558, 128
    %v568 = vsel %vm560, %v558, 128
    %v569 = vsel %vm561, %v558, 128
    %v570 = vsel %vm562, %v558, 128
    %v571 = vsel %vm563, %v558, 128
    %v572 = vsel %vm564, %v558, 128
    %v573 = vsel %vm565, %v558, 128
    %v574 = vsel %vm566, %v558, 128
    %v575 = vrot.slane %v567, 4
    %vm576 = vcmp.lt.s32.totalorder %v567, %v575
    %v577 = vsel %vm576, %v567, %v575
    %v578 = vrot.slane %v577, 2
    %vm579 = vcmp.lt.s32.totalorder %v577, %v578
    %v580 = vsel %vm579, %v577, %v578
    %v581 = vrot.slane %v580, 1
    %vm582 = vcmp.lt.s32.totalorder %v580, %v581
    %v583 = vsel %vm582, %v580, %v581
    %v584 = vrot.slane %v568, 4
    %vm585 = vcmp.lt.s32.totalorder %v568, %v584
    %v586 = vsel %vm585, %v568, %v584
    %v587 = vrot.slane %v586, 2
    %vm588 = vcmp.lt.s32.totalorder %v586, %v587
    %v589 = vsel %vm588, %v586, %v587
    %v590 = vrot.slane %v589, 1
    %vm591 = vcmp.lt.s32.totalorder %v589, %v590
    %v592 = vsel %vm591, %v589, %v590
    %v593 = vrot.slane %v569, 4
    %vm594 = vcmp.lt.s32.totalorder %v569, %v593
    %v595 = vsel %vm594, %v569, %v593
    %v596 = vrot.slane %v595, 2
    %vm597 = vcmp.lt.s32.totalorder %v595, %v596
    %v598 = vsel %vm597, %v595, %v596
    %v599 = vrot.slane %v598, 1
    %vm600 = vcmp.lt.s32.totalorder %v598, %v599
    %v601 = vsel %vm600, %v598, %v599
    %v602 = vrot.slane %v570, 4
    %vm603 = vcmp.lt.s32.totalorder %v570, %v602
    %v604 = vsel %vm603, %v570, %v602
    %v605 = vrot.slane %v604, 2
    %vm606 = vcmp.lt.s32.totalorder %v604, %v605
    %v607 = vsel %vm606, %v604, %v605
    %v608 = vrot.slane %v607, 1
    %vm609 = vcmp.lt.s32.totalorder %v607, %v608
    %v610 = vsel %vm609, %v607, %v608
    %v611 = vrot.slane %v571, 4
    %vm612 = vcmp.lt.s32.totalorder %v571, %v611
    %v613 = vsel %vm612, %v571, %v611
    %v614 = vrot.slane %v613, 2
    %vm615 = vcmp.lt.s32.totalorder %v613, %v614
    %v616 = vsel %vm615, %v613, %v614
    %v617 = vrot.slane %v616, 1
    %vm618 = vcmp.lt.s32.totalorder %v616, %v617
    %v619 = vsel %vm618, %v616, %v617
    %v620 = vrot.slane %v572, 4
    %vm621 = vcmp.lt.s32.totalorder %v572, %v620
    %v622 = vsel %vm621, %v572, %v620
    %v623 = vrot.slane %v622, 2
    %vm624 = vcmp.lt.s32.totalorder %v622, %v623
    %v625 = vsel %vm624, %v622, %v623
    %v626 = vrot.slane %v625, 1
    %vm627 = vcmp.lt.s32.totalorder %v625, %v626
    %v628 = vsel %vm627, %v625, %v626
    %v629 = vrot.slane %v573, 4
    %vm630 = vcmp.lt.s32.totalorder %v573, %v629
    %v631 = vsel %vm630, %v573, %v629
    %v632 = vrot.slane %v631, 2
    %vm633 = vcmp.lt.s32.totalorder %v631, %v632
    %v634 = vsel %vm633, %v631, %v632
    %v635 = vrot.slane %v634, 1
    %vm636 = vcmp.lt.s32.totalorder %v634, %v635
    %v637 = vsel %vm636, %v634, %v635
    %v638 = vrot.slane %v574, 4
    %vm639 = vcmp.lt.s32.totalorder %v574, %v638
    %v640 = vsel %vm639, %v574, %v638
    %v641 = vrot.slane %v640, 2
    %vm642 = vcmp.lt.s32.totalorder %v640, %v641
    %v643 = vsel %vm642, %v640, %v641
    %v644 = vrot.slane %v643, 1
    %vm645 = vcmp.lt.s32.totalorder %v643, %v644
    %v646 = vsel %vm645, %v643, %v644
    %vm647 = vcmp.gt.f32.partialorder %v514, -inf
    %vm648 = vcmp.gt.f32.partialorder %v520, -inf
    %vm649 = vcmp.gt.f32.partialorder %v526, -inf
    %vm650 = vcmp.gt.f32.partialorder %v532, -inf
    %vm651 = vcmp.gt.f32.partialorder %v538, -inf
    %vm652 = vcmp.gt.f32.partialorder %v544, -inf
    %vm653 = vcmp.gt.f32.partialorder %v550, -inf
    %vm654 = vcmp.gt.f32.partialorder %v556, -inf
    %v655 = vsel %vm647, %v583, 0
    %v656 = vsel %vm648, %v592, 0
    %v657 = vsel %vm649, %v601, 0
    %v658 = vsel %vm650, %v610, 0
    %v659 = vsel %vm651, %v619, 0
    %v660 = vsel %vm652, %v628, 0
    %v661 = vsel %vm653, %v637, 0
    %v662 = vsel %vm654, %v646, 0
    %v663 = vsel %vm647, %v514, -inf
    %v664 = vsel %vm648, %v520, -inf
    %v665 = vsel %vm649, %v526, -inf
    %v666 = vsel %vm650, %v532, -inf
    %v667 = vsel %vm651, %v538, -inf
    %v668 = vsel %vm652, %v544, -inf
    %v669 = vsel %vm653, %v550, -inf
    %v670 = vsel %vm654, %v556, -inf
    %v671 = vld [vmem:[%s6 + $0x8] sm:$0xff]
    %v672 = vlaneseq
    %v673 = vshrl.u32 %v672, 7
    %v674 = vadd.s32 %v673, 8
    %675 = vset.pattern.permute.xlu0 %v674
    %676 = vperm.xlu0 %675, %v445
    %v677 = vpop.permute.xlu0 %676
    %v678 = vlaneseq
    %v679 = vshrl.u32 %v678, 7
    %v680 = vadd.s32 %v679, 8
    %681 = vset.pattern.permute.xlu0 %v680
    %682 = vperm.xlu0 %681, %v452
    %v683 = vpop.permute.xlu0 %682
    %v684 = vlaneseq
    %v685 = vshrl.u32 %v684, 7
    %v686 = vadd.s32 %v685, 8
    %687 = vset.pattern.permute.xlu0 %v686
    %688 = vperm.xlu0 %687, %v459
    %v689 = vpop.permute.xlu0 %688
    %v690 = vlaneseq
    %v691 = vshrl.u32 %v690, 7
    %v692 = vadd.s32 %v691, 8
    %693 = vset.pattern.permute.xlu0 %v692
    %694 = vperm.xlu0 %693, %v466
    %v695 = vpop.permute.xlu0 %694
    %v696 = vlaneseq
    %v697 = vshrl.u32 %v696, 7
    %v698 = vadd.s32 %v697, 8
    %699 = vset.pattern.permute.xlu0 %v698
    %700 = vperm.xlu0 %699, %v473
    %v701 = vpop.permute.xlu0 %700
    %v702 = vlaneseq
    %v703 = vshrl.u32 %v702, 7
    %v704 = vadd.s32 %v703, 8
    %705 = vset.pattern.permute.xlu0 %v704
    %706 = vperm.xlu0 %705, %v480
    %v707 = vpop.permute.xlu0 %706
    %v708 = vlaneseq
    %v709 = vshrl.u32 %v708, 7
    %v710 = vadd.s32 %v709, 8
    %711 = vset.pattern.permute.xlu0 %v710
    %712 = vperm.xlu0 %711, %v487
    %v713 = vpop.permute.xlu0 %712
    %v714 = vlaneseq
    %v715 = vshrl.u32 %v714, 7
    %v716 = vadd.s32 %v715, 8
    %717 = vset.pattern.permute.xlu0 %v716
    %718 = vperm.xlu0 %717, %v494
    %v719 = vpop.permute.xlu0 %718
    %v720 = vadd.f32 %v671, %v677
    %v721 = vadd.f32 %v671, %v683
    %v722 = vadd.f32 %v671, %v689
    %v723 = vadd.f32 %v671, %v695
    %v724 = vadd.f32 %v671, %v701
    %v725 = vadd.f32 %v671, %v707
    %v726 = vadd.f32 %v671, %v713
    %v727 = vadd.f32 %v671, %v719
    %v728 = vrot.slane %v720, 4
    %v729 = vmax.f32 %v720, %v728
    %v730 = vrot.slane %v729, 2
    %v731 = vmax.f32 %v729, %v730
    %v732 = vrot.slane %v731, 1
    %v733 = vmax.f32 %v731, %v732
    %v734 = vrot.slane %v721, 4
    %v735 = vmax.f32 %v721, %v734
    %v736 = vrot.slane %v735, 2
    %v737 = vmax.f32 %v735, %v736
    %v738 = vrot.slane %v737, 1
    %v739 = vmax.f32 %v737, %v738
    %v740 = vrot.slane %v722, 4
    %v741 = vmax.f32 %v722, %v740
    %v742 = vrot.slane %v741, 2
    %v743 = vmax.f32 %v741, %v742
    %v744 = vrot.slane %v743, 1
    %v745 = vmax.f32 %v743, %v744
    %v746 = vrot.slane %v723, 4
    %v747 = vmax.f32 %v723, %v746
    %v748 = vrot.slane %v747, 2
    %v749 = vmax.f32 %v747, %v748
    %v750 = vrot.slane %v749, 1
    %v751 = vmax.f32 %v749, %v750
    %v752 = vrot.slane %v724, 4
    %v753 = vmax.f32 %v724, %v752
    %v754 = vrot.slane %v753, 2
    %v755 = vmax.f32 %v753, %v754
    %v756 = vrot.slane %v755, 1
    %v757 = vmax.f32 %v755, %v756
    %v758 = vrot.slane %v725, 4
    %v759 = vmax.f32 %v725, %v758
    %v760 = vrot.slane %v759, 2
    %v761 = vmax.f32 %v759, %v760
    %v762 = vrot.slane %v761, 1
    %v763 = vmax.f32 %v761, %v762
    %v764 = vrot.slane %v726, 4
    %v765 = vmax.f32 %v726, %v764
    %v766 = vrot.slane %v765, 2
    %v767 = vmax.f32 %v765, %v766
    %v768 = vrot.slane %v767, 1
    %v769 = vmax.f32 %v767, %v768
    %v770 = vrot.slane %v727, 4
    %v771 = vmax.f32 %v727, %v770
    %v772 = vrot.slane %v771, 2
    %v773 = vmax.f32 %v771, %v772
    %v774 = vrot.slane %v773, 1
    %v775 = vmax.f32 %v773, %v774
    %v776 = vadd.s32 %v558, 8
    %vm777 = vcmp.eq.f32.partialorder %v720, %v733
    %vm778 = vcmp.eq.f32.partialorder %v721, %v739
    %vm779 = vcmp.eq.f32.partialorder %v722, %v745
    %vm780 = vcmp.eq.f32.partialorder %v723, %v751
    %vm781 = vcmp.eq.f32.partialorder %v724, %v757
    %vm782 = vcmp.eq.f32.partialorder %v725, %v763
    %vm783 = vcmp.eq.f32.partialorder %v726, %v769
    %vm784 = vcmp.eq.f32.partialorder %v727, %v775
    %v785 = vsel %vm777, %v776, 128
    %v786 = vsel %vm778, %v776, 128
    %v787 = vsel %vm779, %v776, 128
    %v788 = vsel %vm780, %v776, 128
    %v789 = vsel %vm781, %v776, 128
    %v790 = vsel %vm782, %v776, 128
    %v791 = vsel %vm783, %v776, 128
    %v792 = vsel %vm784, %v776, 128
    %v793 = vrot.slane %v785, 4
    %vm794 = vcmp.lt.s32.totalorder %v785, %v793
    %v795 = vsel %vm794, %v785, %v793
    %v796 = vrot.slane %v795, 2
    %vm797 = vcmp.lt.s32.totalorder %v795, %v796
    %v798 = vsel %vm797, %v795, %v796
    %v799 = vrot.slane %v798, 1
    %vm800 = vcmp.lt.s32.totalorder %v798, %v799
    %v801 = vsel %vm800, %v798, %v799
    %v802 = vrot.slane %v786, 4
    %vm803 = vcmp.lt.s32.totalorder %v786, %v802
    %v804 = vsel %vm803, %v786, %v802
    %v805 = vrot.slane %v804, 2
    %vm806 = vcmp.lt.s32.totalorder %v804, %v805
    %v807 = vsel %vm806, %v804, %v805
    %v808 = vrot.slane %v807, 1
    %vm809 = vcmp.lt.s32.totalorder %v807, %v808
    %v810 = vsel %vm809, %v807, %v808
    %v811 = vrot.slane %v787, 4
    %vm812 = vcmp.lt.s32.totalorder %v787, %v811
    %v813 = vsel %vm812, %v787, %v811
    %v814 = vrot.slane %v813, 2
    %vm815 = vcmp.lt.s32.totalorder %v813, %v814
    %v816 = vsel %vm815, %v813, %v814
    %v817 = vrot.slane %v816, 1
    %vm818 = vcmp.lt.s32.totalorder %v816, %v817
    %v819 = vsel %vm818, %v816, %v817
    %v820 = vrot.slane %v788, 4
    %vm821 = vcmp.lt.s32.totalorder %v788, %v820
    %v822 = vsel %vm821, %v788, %v820
    %v823 = vrot.slane %v822, 2
    %vm824 = vcmp.lt.s32.totalorder %v822, %v823
    %v825 = vsel %vm824, %v822, %v823
    %v826 = vrot.slane %v825, 1
    %vm827 = vcmp.lt.s32.totalorder %v825, %v826
    %v828 = vsel %vm827, %v825, %v826
    %v829 = vrot.slane %v789, 4
    %vm830 = vcmp.lt.s32.totalorder %v789, %v829
    %v831 = vsel %vm830, %v789, %v829
    %v832 = vrot.slane %v831, 2
    %vm833 = vcmp.lt.s32.totalorder %v831, %v832
    %v834 = vsel %vm833, %v831, %v832
    %v835 = vrot.slane %v834, 1
    %vm836 = vcmp.lt.s32.totalorder %v834, %v835
    %v837 = vsel %vm836, %v834, %v835
    %v838 = vrot.slane %v790, 4
    %vm839 = vcmp.lt.s32.totalorder %v790, %v838
    %v840 = vsel %vm839, %v790, %v838
    %v841 = vrot.slane %v840, 2
    %vm842 = vcmp.lt.s32.totalorder %v840, %v841
    %v843 = vsel %vm842, %v840, %v841
    %v844 = vrot.slane %v843, 1
    %vm845 = vcmp.lt.s32.totalorder %v843, %v844
    %v846 = vsel %vm845, %v843, %v844
    %v847 = vrot.slane %v791, 4
    %vm848 = vcmp.lt.s32.totalorder %v791, %v847
    %v849 = vsel %vm848, %v791, %v847
    %v850 = vrot.slane %v849, 2
    %vm851 = vcmp.lt.s32.totalorder %v849, %v850
    %v852 = vsel %vm851, %v849, %v850
    %v853 = vrot.slane %v852, 1
    %vm854 = vcmp.lt.s32.totalorder %v852, %v853
    %v855 = vsel %vm854, %v852, %v853
    %v856 = vrot.slane %v792, 4
    %vm857 = vcmp.lt.s32.totalorder %v792, %v856
    %v858 = vsel %vm857, %v792, %v856
    %v859 = vrot.slane %v858, 2
    %vm860 = vcmp.lt.s32.totalorder %v858, %v859
    %v861 = vsel %vm860, %v858, %v859
    %v862 = vrot.slane %v861, 1
    %vm863 = vcmp.lt.s32.totalorder %v861, %v862
    %v864 = vsel %vm863, %v861, %v862
    %vm865 = vcmp.gt.f32.partialorder %v733, %v663
    %vm866 = vcmp.gt.f32.partialorder %v739, %v664
    %vm867 = vcmp.gt.f32.partialorder %v745, %v665
    %vm868 = vcmp.gt.f32.partialorder %v751, %v666
    %vm869 = vcmp.gt.f32.partialorder %v757, %v667
    %vm870 = vcmp.gt.f32.partialorder %v763, %v668
    %vm871 = vcmp.gt.f32.partialorder %v769, %v669
    %vm872 = vcmp.gt.f32.partialorder %v775, %v670
    %v873 = vsel %vm865, %v801, %v655
    %v874 = vsel %vm866, %v810, %v656
    %v875 = vsel %vm867, %v819, %v657
    %v876 = vsel %vm868, %v828, %v658
    %v877 = vsel %vm869, %v837, %v659
    %v878 = vsel %vm870, %v846, %v660
    %v879 = vsel %vm871, %v855, %v661
    %v880 = vsel %vm872, %v864, %v662
    %v881 = vsel %vm865, %v733, %v663
    %v882 = vsel %vm866, %v739, %v664
    %v883 = vsel %vm867, %v745, %v665
    %v884 = vsel %vm868, %v751, %v666
    %v885 = vsel %vm869, %v757, %v667
    %v886 = vsel %vm870, %v763, %v668
    %v887 = vsel %vm871, %v769, %v669
    %v888 = vsel %vm872, %v775, %v670
    %v889 = vsel %vm443, 1, 0
    %890 = vset.pattern.permute.xlu0 0
    %891 = vperm.xlu0 %890, %v889
    %v892 = vpop.permute.xlu0 %891
    %vm893 = vcmp.eq.s32.totalorder %v892, 1
    %vm894 = vcmask 1041409
    %v895 = vsel %vm894, %v874, %v873
    %vm896 = vcmask 1042434
    %v897 = vsel %vm896, %v875, %v895
    %vm898 = vcmask 1043459
    %v899 = vsel %vm898, %v876, %v897
    %vm900 = vcmask 1044484
    %v901 = vsel %vm900, %v877, %v899
    %vm902 = vcmask 1045509
    %v903 = vsel %vm902, %v878, %v901
    %vm904 = vcmask 1046534
    %v905 = vsel %vm904, %v879, %v903
    %vm906 = vcmask 1047559
    %v907 = vsel %vm906, %v880, %v905
    %v908 = vsel %vm893, %v907, 0
    %s909 = scalar_lea.vmem [#allocation6], %s438
    %910 = vst [vmem:[%s909] sm:$0xff] %v908
    %v919 = vsel %vm894, %v882, %v881
    %v920 = vsel %vm896, %v883, %v919
    %v921 = vsel %vm898, %v884, %v920
    %v922 = vsel %vm900, %v885, %v921
    %v923 = vsel %vm902, %v886, %v922
    %v924 = vsel %vm904, %v887, %v923
    %v925 = vsel %vm906, %v888, %v924
    %v927 = vadd.f32 %v440, %v925
    %v928 = vsel %vm893, %v927, %v437
  $region53: #{bilstm_crf_forward.1} parent=0 // loop_footer
    %s436 = sadd.s32 1, %s432
  $region54: #{bilstm_crf_forward.1} parent=0 // loop_footer_branch
    %431 = sbr.rel target = $region50
  $region55: #{bilstm_crf_forward.1} parent=0 // loop_exit
    _
  %v929 = vld [vmem:[%s7] sm:$0x1]
  %v931 = vperm.slane %v929, 0
  %v933 = vadd.f32 %v437, %v931
  %934 = vmax.xlane.f32.xlu0 %v933
  %v935 = vpop.xlane.xlu0 %934
  %vm936 = vcmp.eq.f32.partialorder %v933, %v935
  %v937 = vsel %vm936, %v155, 128
  %v938 = vand.u32 %v937, 65535
  %v939 = vshra.s32 %v937, 16
  %v940 = vcvt.s32.f32 %v938
  %v941 = vcvt.s32.f32 %v939
  %942 = vmin.xlane.f32.xlu0 %v941
  %v943 = vpop.xlane.xlu0 %942
  %vm944 = vcmp.eq.f32.partialorder %v941, %v943
  %v945 = vsel %vm944, %v940, inf
  %946 = vmin.xlane.f32.xlu0 %v945
  %v947 = vpop.xlane.xlu0 %946
  %v948 = vcvt.f32.s32 %v947
  %v949 = vcvt.f32.s32 %v943
  %v950 = vshll.u32 %v949, 16
  %v951 = vadd.s32 %v950, %v948
  %vm952 = vcmask 7168
  %953 = vst.msk [vmem:[%s10 + $0x38] sm:$0xff] %vm952, %v951
  %v954 = vld [vmem:[%s9] sm:$0xff]
  %v955 = vsub.s32 %v954, 1
  loop: start=0, step=1, limit=7
  $region56: #{bilstm_crf_forward.1} parent=0 // loop_pre_header
    _
  $region57: #{bilstm_crf_forward.1} parent=0 // loop_header
    %s957 = sphi 0, %s961
    %p958 = scmp.ge.s32.totalorder %s957, 7
    %v962 = vphi %v951, %v989
  $region58: #{bilstm_crf_forward.1} parent=0 // loop_header_branch
    %960 = sbr.rel (%p958) target = $region62
  $region59: #{bilstm_crf_forward.1} parent=0 // loop_body
    %s963 = ssub.s32 6, %s957
    %s964 = ssub.s32 7, %s957
    %s965 = smul.u32 %s964, 8
    %s966 = scalar_lea.vmem [#allocation6], %s965
    %v967 = vld [vmem:[%s966] sm:$0xff]
    %968 = vset.pattern.permute.xlu0 0
    %969 = vperm.xlu0 %968, %v962
    %v970 = vpop.permute.xlu0 %969
    %vm971 = vcmp.eq.s32.totalorder %v155, %v970
    %v972 = vsel %vm971, %v967, 128
    %v973 = vand.u32 %v972, 65535
    %v974 = vshra.s32 %v972, 16
    %v975 = vcvt.s32.f32 %v973
    %v976 = vcvt.s32.f32 %v974
    %977 = vmin.xlane.f32.xlu0 %v976
    %v978 = vpop.xlane.xlu0 %977
    %vm979 = vcmp.eq.f32.partialorder %v976, %v978
    %v980 = vsel %vm979, %v975, inf
    %981 = vmin.xlane.f32.xlu0 %v980
    %v982 = vpop.xlane.xlu0 %981
    %v983 = vcvt.f32.s32 %v982
    %v984 = vcvt.f32.s32 %v978
    %v985 = vshll.u32 %v984, 16
    %v986 = vadd.s32 %v985, %v983
    %v987 = vstv %s963
    %vm988 = vcmp.eq.s32.totalorder %v955, %v987
    %v989 = vsel %vm988, %v962, %v986
    %s990 = smul.u32 %s963, 8
    %s991 = scalar_lea.vmem %s10, %s990
    %992 = vst.msk [vmem:[%s991] sm:$0xff] %vm952, %v989
  $region60: #{bilstm_crf_forward.1} parent=0 // loop_footer
    %s961 = sadd.s32 1, %s957
  $region61: #{bilstm_crf_forward.1} parent=0 // loop_footer_branch
    %956 = sbr.rel target = $region57
  $region62: #{bilstm_crf_forward.1} parent=0 // loop_exit
    _
  // Predicated region
  $region63: #{bilstm_crf_forward.1} parent=0 // pred_check
    _
  $region64: #{bilstm_crf_forward.1} parent=0 // pred_check_branch
    %994 = sbr.rel (0) target = $region66
  $region65: #{bilstm_crf_forward.1} parent=0 // pred_region
    _
  $region66: #{bilstm_crf_forward.1} parent=0 // pred_fallthru
    _
  // Predicated region
  $region67: #{bilstm_crf_forward.1} parent=0 // pred_check
    _
  $region68: #{bilstm_crf_forward.1} parent=0 // pred_check_branch
    %996 = sbr.rel (0) target = $region70
  $region69: #{bilstm_crf_forward.1} parent=0 // pred_region
    _
  $region70: #{bilstm_crf_forward.1} parent=0 // pred_fallthru
    _

</llo_original>
